<compile_context>
chip_gen: v6e
topology: v6e:2x2x1
jax: 0.10.0
libtpu: 0.0.40
codegen_flags: <defaults>
</compile_context>

<pallas_src>
import functools
import math

import jax
import jax.numpy as jnp
import numpy as np
from jax.experimental import pallas as pl
from jax.experimental.pallas import tpu as pltpu


# ---------------------------------------------------------------------------
# Host-side: fold ROIAlign (aligned=True, sampling_ratio=0) bin averaging into
# one per-RoI linear map M: bins[b, :] @ X_flat gives the pooled bin values.
# ---------------------------------------------------------------------------
def _axis_weights(start, bin_sz, grid, size, res, max_grid):
    """Summed (masked) bilinear weights along one spatial axis -> (R, res, size)."""
    p = jnp.arange(res, dtype=jnp.float32)[None, :, None]           # (1,res,1)
    i = jnp.arange(max_grid, dtype=jnp.float32)[None, None, :]      # (1,1,G)
    g = jnp.maximum(grid, 1).astype(jnp.float32)[:, None, None]     # (R,1,1)
    coord = (start[:, None, None] + p * bin_sz[:, None, None]
             + (i + 0.5) * bin_sz[:, None, None] / g)               # (R,res,G)
    in_grid = i < grid.astype(jnp.float32)[:, None, None]           # (R,1,G)
    valid = (coord >= -1.0) & (coord <= float(size))                # (R,res,G)
    cc = jnp.clip(coord, 0.0, float(size - 1))
    pix = jnp.arange(size, dtype=jnp.float32)                       # (size,)
    tri = jnp.maximum(0.0, 1.0 - jnp.abs(cc[..., None] - pix))      # (R,res,G,size)
    w = jnp.where((in_grid & valid)[..., None], tri, 0.0)
    return jnp.sum(w, axis=2)                                       # (R,res,size)


def _roi_align_pool_matrix(boxes, spatial_scale, res, H, W):
    """Per-RoI matrix (R, res*res, H*W): ROIAlign(aligned=True, sampling_ratio=0)
    bin averaging as a linear map over the (T-averaged) spatial feature map."""
    boxes = boxes.astype(jnp.float32)
    x1, y1, x2, y2 = boxes[:, 0], boxes[:, 1], boxes[:, 2], boxes[:, 3]
    start_w = x1 * spatial_scale - 0.5
    start_h = y1 * spatial_scale - 0.5
    roi_w = (x2 - x1) * spatial_scale
    roi_h = (y2 - y1) * spatial_scale
    bin_w = roi_w / res
    bin_h = roi_h / res
    grid_h = jnp.ceil(roi_h / res).astype(jnp.int32)    # sampling_ratio = 0 (adaptive)
    grid_w = jnp.ceil(roi_w / res).astype(jnp.int32)
    count = jnp.maximum(grid_h * grid_w, 1).astype(jnp.float32)

    # TODO(synk): static bound on the adaptive sampling grid assumes the boxes
    # lie (approximately) inside the image; larger boxes would drop samples.
    max_grid = int(math.ceil(max(H, W) / res)) + 2
    wy = _axis_weights(start_h, bin_h, grid_h, H, res, max_grid)    # (R,res,H)
    wx = _axis_weights(start_w, bin_w, grid_w, W, res, max_grid)    # (R,res,W)

    m = jnp.einsum('rph,rqw->rpqhw', wy, wx)                        # (R,res,res,H,W)
    m = m.reshape(boxes.shape[0], res * res, H * W) / count[:, None, None]
    return m                                                        # (R, B, HW)


# ---------------------------------------------------------------------------
# Fused Pallas kernel: per RoI-tile pooling + bin-max + projection + activation
# ---------------------------------------------------------------------------
def _make_head_kernel(roi_tile, b0, b1, act_func):
    def kernel(tb_ref, slow_ref, fast_ref, ms_ref, mf_ref,
               ws_ref, wf_ref, bias_ref, act_ref, fs_ref, ff_ref):
        del tb_ref  # consumed by the index_maps (scalar prefetch)
        xs = slow_ref[0]                                   # (HW, C0) native dtype
        xf = fast_ref[0]                                   # (HW, C1)
        # temporal mean is already folded in; ROIAlign bin averages as MXU GEMMs
        bins_s = jnp.dot(ms_ref[0], xs,
                         preferred_element_type=jnp.float32)   # (roi_tile*B0, C0)
        bins_f = jnp.dot(mf_ref[0], xf,
                         preferred_element_type=jnp.float32)   # (roi_tile*B1, C1)
        # MaxPool2d over the full RoI resolution == max over each RoI's bin rows
        ps = jnp.concatenate(
            [jnp.max(bins_s[i * b0:(i + 1) * b0, :], axis=0, keepdims=True)
             for i in range(roi_tile)], axis=0)                 # (roi_tile, C0)
        pf = jnp.concatenate(
            [jnp.max(bins_f[i * b1:(i + 1) * b1, :], axis=0, keepdims=True)
             for i in range(roi_tile)], axis=0)                 # (roi_tile, C1)
        # features (post-concat/view, pre-projection) -- two lane-aligned outputs
        fs_ref[...] = ps.astype(fs_ref.dtype)
        ff_ref[...] = pf.astype(ff_ref.dtype)
        # projection: weight pre-split per pathway -> no in-kernel concat
        logits = (jnp.dot(ps, ws_ref[...], preferred_element_type=jnp.float32)
                  + jnp.dot(pf, wf_ref[...], preferred_element_type=jnp.float32)
                  + bias_ref[...])                              # (roi_tile, K)
        if act_func == "softmax":
            mx = jnp.max(logits, axis=-1, keepdims=True)
            e = jnp.exp(logits - mx)
            s = jnp.sum(e, axis=-1, keepdims=True)
            r = pl.reciprocal(s, approx=True)                   # EUP slot
            r = r * (2.0 - s * r)                               # one Newton step
            act_ref[...] = e * r
        elif act_func == "sigmoid":
            act_ref[...] = 1.0 / (1.0 + jnp.exp(-logits))
        else:
            raise NotImplementedError(act_func)
    return kernel


def resnet_mod_roi_head_forward(inputs, bboxes, weight, bias,
                                resolution=(5, 5), scale_factor=(4, 4),
                                act_func="softmax", roi_tile=8):
    """inputs = (slow NCTHW, fast NCTHW); bboxes (R, 5) = [batch_idx, x1, y1, x2, y2].
    Returns (activations (R, num_classes), features (R, sum(dim_in)))."""
    slow, fast = inputs
    N, C0, T0, H, W = slow.shape
    _, C1, T1, H1, W1 = fast.shape
    assert (H, W) == (H1, W1), "pathways must share spatial dims"
    assert bboxes.shape[1] == 5
    assert roi_tile >= 8 and roi_tile % 8 == 0, "roi_tile must be sublane-aligned"
    R = bboxes.shape[0]
    K = weight.shape[0]
    HW = H * W
    res0, res1 = resolution
    B0, B1 = res0 * res0, res1 * res1

    batch_idx = bboxes[:, 0].astype(jnp.int32)
    boxes = bboxes[:, 1:5]

    # ---- XLA prologue: RoI-independent temporal mean; features -> (N, HW, C)
    slow_t = jnp.mean(slow, axis=2).reshape(N, C0, HW).swapaxes(1, 2)
    fast_t = jnp.mean(fast, axis=2).reshape(N, C1, HW).swapaxes(1, 2)

    # ---- per-RoI ROIAlign matrices (bins x pixels)
    ms = _roi_align_pool_matrix(boxes, 1.0 / scale_factor[0], res0, H, W)   # (R,B0,HW)
    mf = _roi_align_pool_matrix(boxes, 1.0 / scale_factor[1], res1, H, W)   # (R,B1,HW)

    # ---- group RoIs by batch index; pad every group to a multiple of roi_tile
    # so each grid step touches exactly one batch element and same-batch tiles
    # reuse the resident feature slab.  Static worst-case padded size:
    r_pad = pl.cdiv(R + N * (roi_tile - 1), roi_tile) * roi_tile
    num_tiles = r_pad // roi_tile

    order = jnp.argsort(batch_idx)
    b_sorted = batch_idx[order]
    counts = jnp.sum(batch_idx[None, :] == jnp.arange(N, dtype=jnp.int32)[:, None],
                     axis=1).astype(jnp.int32)
    padded_counts = ((counts + roi_tile - 1) // roi_tile) * roi_tile
    group_pad_start = jnp.concatenate(
        [jnp.zeros((1,), jnp.int32), jnp.cumsum(padded_counts)[:-1].astype(jnp.int32)])
    group_sort_start = jnp.concatenate(
        [jnp.zeros((1,), jnp.int32), jnp.cumsum(counts)[:-1].astype(jnp.int32)])
    rank = jnp.arange(R, dtype=jnp.int32) - group_sort_start[b_sorted]
    dest = group_pad_start[b_sorted] + rank                 # padded slot per sorted RoI
    slot_of_orig = jnp.zeros((R,), jnp.int32).at[order].set(dest)

    # per-tile batch index (scalar-prefetch operand); unused trailing tiles -> 0
    tile_starts = group_pad_start // roi_tile
    tile_counts = padded_counts // roi_tile
    t_idx = jnp.arange(num_tiles, dtype=jnp.int32)
    in_group = ((t_idx[None, :] >= tile_starts[:, None])
                & (t_idx[None, :] < (tile_starts + tile_counts)[:, None]))
    tile_bidx = jnp.sum(jnp.where(in_group, jnp.arange(N, dtype=jnp.int32)[:, None], 0),
                        axis=0).astype(jnp.int32)

    # scatter pooling matrices into padded slots (padded slots stay all-zero ->
    # zero bins/features which are discarded by the output gather, so the
    # in-kernel max never sees spurious padding values for real RoIs).
    ms_pad = jnp.zeros((r_pad, B0, HW), jnp.float32).at[dest].set(ms[order])
    mf_pad = jnp.zeros((r_pad, B1, HW), jnp.float32).at[dest].set(mf[order])
    ms_tiles = ms_pad.reshape(num_tiles, roi_tile * B0, HW)
    mf_tiles = mf_pad.reshape(num_tiles, roi_tile * B1, HW)

    # projection weight pre-transposed and split per pathway
    w_t = weight.T.astype(jnp.float32)                      # (Ctot, K)
    ws_t = w_t[:C0]                                         # (C0, K)
    wf_t = w_t[C0:]                                         # (C1, K)
    b2 = bias.reshape(1, K).astype(jnp.float32)

    grid_spec = pltpu.PrefetchScalarGridSpec(
        num_scalar_prefetch=1,
        grid=(num_tiles,),
        in_specs=[
            pl.BlockSpec((1, HW, C0), lambda t, tb: (tb[t], 0, 0)),
            pl.BlockSpec((1, HW, C1), lambda t, tb: (tb[t], 0, 0)),
            pl.BlockSpec((1, roi_tile * B0, HW), lambda t, tb: (t, 0, 0)),
            pl.BlockSpec((1, roi_tile * B1, HW), lambda t, tb: (t, 0, 0)),
            pl.BlockSpec((C0, K), lambda t, tb: (0, 0)),
            pl.BlockSpec((C1, K), lambda t, tb: (0, 0)),
            pl.BlockSpec((1, K), lambda t, tb: (0, 0)),
        ],
        out_specs=[
            pl.BlockSpec((roi_tile, K), lambda t, tb: (t, 0)),
            pl.BlockSpec((roi_tile, C0), lambda t, tb: (t, 0)),
            pl.BlockSpec((roi_tile, C1), lambda t, tb: (t, 0)),
        ],
    )

    # explicit VMEM budget from the actual block set (double-buffered streams
    # plus resident weights), clamped to stay safe on v7x's smaller VMEM.
    itemsize = jnp.dtype(slow_t.dtype).itemsize
    block_bytes = (2 * (HW * C0 * itemsize + HW * C1 * itemsize
                        + roi_tile * B0 * HW * 4 + roi_tile * B1 * HW * 4
                        + roi_tile * (K + C0 + C1) * 4)
                   + 2 * (C0 * K + C1 * K + K) * 4)
    vmem_limit = int(min(max(4 * block_bytes, 16 * 1024 * 1024), 64 * 1024 * 1024))

    act_pad, fs_pad, ff_pad = pl.pallas_call(
        _make_head_kernel(roi_tile, B0, B1, act_func),
        out_shape=(jax.ShapeDtypeStruct((r_pad, K), jnp.float32),
                   jax.ShapeDtypeStruct((r_pad, C0), jnp.float32),
                   jax.ShapeDtypeStruct((r_pad, C1), jnp.float32)),
        grid_spec=grid_spec,
        compiler_params=pltpu.CompilerParams(
            dimension_semantics=("parallel",),          # RoI tiles across v7x cores
            vmem_limit_bytes=vmem_limit),
    )(tile_bidx, slow_t, fast_t, ms_tiles, mf_tiles, ws_t, wf_t, b2)

    # inverse-permute padded/sorted outputs back to the original RoI order
    act = act_pad[slot_of_orig]
    feat = jnp.concatenate([fs_pad, ff_pad], axis=1)[slot_of_orig]
    return act, feat


# ---------------------------------------------------------------------------
# Independent numpy reference (mirrors the torchvision ROIAlign kernel)
# ---------------------------------------------------------------------------
def _bilinear_np(img, y, x):
    C, H, W = img.shape
    if y < -1.0 or y > H or x < -1.0 or x > W:
        return np.zeros((C,), np.float64)
    y = max(y, 0.0); x = max(x, 0.0)
    y_low = int(y); x_low = int(x)
    if y_low >= H - 1:
        y_high = y_low = H - 1; y = float(y_low)
    else:
        y_high = y_low + 1
    if x_low >= W - 1:
        x_high = x_low = W - 1; x = float(x_low)
    else:
        x_high = x_low + 1
    ly = y - y_low; lx = x - x_low; hy = 1.0 - ly; hx = 1.0 - lx
    return (hy * hx * img[:, y_low, x_low] + hy * lx * img[:, y_low, x_high]
            + ly * hx * img[:, y_high, x_low] + ly * lx * img[:, y_high, x_high])


def _roi_align_np(feat, boxes, batch_idx, spatial_scale, res):
    N, C, H, W = feat.shape
    R = boxes.shape[0]
    out = np.zeros((R, C, res, res), np.float64)
    for r in range(R):
        x1, y1, x2, y2 = [float(v) for v in boxes[r]]
        b = int(batch_idx[r])
        start_w = x1 * spatial_scale - 0.5
        start_h = y1 * spatial_scale - 0.5
        roi_w = (x2 - x1) * spatial_scale
        roi_h = (y2 - y1) * spatial_scale
        bin_h = roi_h / res; bin_w = roi_w / res
        gh = int(np.ceil(roi_h / res)); gw = int(np.ceil(roi_w / res))
        count = max(gh * gw, 1)
        for ph in range(res):
            for pw in range(res):
                acc = np.zeros((C,), np.float64)
                for iy in range(gh):
                    yy = start_h + ph * bin_h + (iy + 0.5) * bin_h / gh
                    for ix in range(gw):
                        xx = start_w + pw * bin_w + (ix + 0.5) * bin_w / gw
                        acc += _bilinear_np(feat[b], yy, xx)
                out[r, :, ph, pw] = acc / count
    return out


def _reference_forward(slow, fast, bboxes, weight, bias, resolution, scale_factor):
    bboxes = np.asarray(bboxes, np.float64)
    batch_idx = bboxes[:, 0].astype(np.int32); boxes = bboxes[:, 1:5]
    pooled = []
    for x, res, sf in ((np.asarray(slow, np.float64), resolution[0], scale_factor[0]),
                       (np.asarray(fast, np.float64), resolution[1], scale_factor[1])):
        xm = x.mean(axis=2)                                    # AvgPool3d over T
        roi = _roi_align_np(xm, boxes, batch_idx, 1.0 / sf, res)
        pooled.append(roi.max(axis=(2, 3)))                    # MaxPool2d
    feats = np.concatenate(pooled, axis=1)                     # (R, Ctot)
    logits = feats @ np.asarray(weight, np.float64).T + np.asarray(bias, np.float64)
    e = np.exp(logits - logits.max(axis=1, keepdims=True))
    return e / e.sum(axis=1, keepdims=True), feats


# ---------------------------------------------------------------------------
if __name__ == "__main__":
    key = jax.random.PRNGKey(0)
    N = 2
    C0, C1 = 16, 4              # dim_in (slow, fast)
    T0, T1 = 2, 8               # pool_size[p][0] == T_p
    H = W = 16                  # feature-map spatial size
    RES = (5, 5)                # ROIAlign resolution per pathway
    SCALE = (4, 4)              # scale_factor -> spatial_scale = 1/4
    NUM_CLASSES = 10
    R = 3                       # number of RoIs

    k1, k2, k3, k4, k5, k6 = jax.random.split(key, 6)
    slow = jax.random.normal(k1, (N, C0, T0, H, W), jnp.float32)
    fast = jax.random.normal(k2, (N, C1, T1, H, W), jnp.float32)

    # boxes in input-image coordinates (image side = H * scale_factor = 64)
    img = float(H * SCALE[0])
    xy1 = jax.random.uniform(k3, (R, 2), jnp.float32, 0.0, img * 0.6)
    wh = jax.random.uniform(k4, (R, 2), jnp.float32, img * 0.1, img * 0.4)
    xy2 = jnp.minimum(xy1 + wh, img)
    bidx = jnp.array([0.0, 1.0, 1.0], jnp.float32)[:, None]
    bboxes = jnp.concatenate([bidx, xy1[:, :1], xy1[:, 1:], xy2[:, :1], xy2[:, 1:]],
                             axis=1)                            # (R, 5)

    # nn.Linear default init: U(-1/sqrt(fan_in), 1/sqrt(fan_in))
    bound = 1.0 / float(np.sqrt(C0 + C1))
    weight = jax.random.uniform(k5, (NUM_CLASSES, C0 + C1), jnp.float32, -bound, bound)
    bias = jax.random.uniform(k6, (NUM_CLASSES,), jnp.float32, -bound, bound)

    fwd = jax.jit(functools.partial(resnet_mod_roi_head_forward,
                                    resolution=RES, scale_factor=SCALE,
                                    roi_tile=8))
    act, feat = fwd((slow, fast), bboxes, weight, bias)
    act, feat = jax.block_until_ready((act, feat))

    ref_act, ref_feat = _reference_forward(np.asarray(slow), np.asarray(fast),
                                           np.asarray(bboxes), np.asarray(weight),
                                           np.asarray(bias), RES, SCALE)
    assert np.allclose(np.asarray(feat), ref_feat, rtol=1e-4, atol=1e-4), \
        "features mismatch vs reference"
    assert np.allclose(np.asarray(act), ref_act, rtol=1e-4, atol=1e-4), \
        "activations mismatch vs reference"

    print("KERNEL_OK")
</pallas_src>

<mosaic_0001>
module attributes {stable_mosaic.version = 11 : i64} {
  func.func @kernel(%arg0: i32, %arg1: memref<3xi32, #tpu.memory_space<smem>>, %arg2: memref<1x256x16xf32, #tpu.memory_space<vmem>>, %arg3: memref<1x256x4xf32, #tpu.memory_space<vmem>>, %arg4: memref<1x200x256xf32, #tpu.memory_space<vmem>>, %arg5: memref<1x200x256xf32, #tpu.memory_space<vmem>>, %arg6: memref<16x10xf32, #tpu.memory_space<vmem>>, %arg7: memref<4x10xf32, #tpu.memory_space<vmem>>, %arg8: memref<1x10xf32, #tpu.memory_space<vmem>>, %arg9: memref<8x10xf32, #tpu.memory_space<vmem>>, %arg10: memref<8x16xf32, #tpu.memory_space<vmem>>, %arg11: memref<8x4xf32, #tpu.memory_space<vmem>>) attributes {dimension_semantics = [#tpu.dimension_semantics<parallel>], iteration_bounds = array<i64: 3>, scalar_prefetch = 1 : i64, scratch_operands = 0 : i64, tpu.core_type = #tpu.core_type<tc>, window_params = [{transform_indices = @transform_0, window_bounds = array<i64: 1, 256, 16>}, {transform_indices = @transform_1, window_bounds = array<i64: 1, 256, 4>}, {transform_indices = @transform_2, window_bounds = array<i64: 1, 200, 256>}, {transform_indices = @transform_3, window_bounds = array<i64: 1, 200, 256>}, {pipeline_mode = #tpu.pipeline_mode<synchronous>, transform_indices = @transform_4, window_bounds = array<i64: 16, 10>}, {pipeline_mode = #tpu.pipeline_mode<synchronous>, transform_indices = @transform_5, window_bounds = array<i64: 4, 10>}, {pipeline_mode = #tpu.pipeline_mode<synchronous>, transform_indices = @transform_6, window_bounds = array<i64: 1, 10>}, {transform_indices = @transform_7, window_bounds = array<i64: 8, 10>}, {transform_indices = @transform_8, window_bounds = array<i64: 8, 16>}, {transform_indices = @transform_9, window_bounds = array<i64: 8, 4>}]} {
    %c0 = arith.constant 0 : index
    %c0_0 = arith.constant 0 : index
    %c0_1 = arith.constant 0 : index
    %0 = vector.load %arg2[%c0, %c0_0, %c0_1] : memref<1x256x16xf32, #tpu.memory_space<vmem>>, vector<1x256x16xf32>
    %1 = vector.shape_cast %0 : vector<1x256x16xf32> to vector<256x16xf32>
    %c0_2 = arith.constant 0 : index
    %c0_3 = arith.constant 0 : index
    %c0_4 = arith.constant 0 : index
    %2 = vector.load %arg3[%c0_2, %c0_3, %c0_4] : memref<1x256x4xf32, #tpu.memory_space<vmem>>, vector<1x256x4xf32>
    %3 = vector.shape_cast %2 : vector<1x256x4xf32> to vector<256x4xf32>
    %c0_5 = arith.constant 0 : index
    %c0_6 = arith.constant 0 : index
    %c0_7 = arith.constant 0 : index
    %4 = vector.load %arg4[%c0_5, %c0_6, %c0_7] : memref<1x200x256xf32, #tpu.memory_space<vmem>>, vector<1x200x256xf32>
    %5 = vector.shape_cast %4 : vector<1x200x256xf32> to vector<200x256xf32>
    %cst = arith.constant dense<0.000000e+00> : vector<200x16xf32>
    %6 = tpu.matmul %5, %1, %cst {dimension_numbers = #tpu.dot_dimension_numbers<[1], [0], [0], [1], [0, 0, 1, 1], [], []>} : vector<200x256xf32>, vector<256x16xf32>, vector<200x16xf32> -> vector<200x16xf32>
    %c0_8 = arith.constant 0 : index
    %c0_9 = arith.constant 0 : index
    %c0_10 = arith.constant 0 : index
    %7 = vector.load %arg5[%c0_8, %c0_9, %c0_10] : memref<1x200x256xf32, #tpu.memory_space<vmem>>, vector<1x200x256xf32>
    %8 = vector.shape_cast %7 : vector<1x200x256xf32> to vector<200x256xf32>
    %cst_11 = arith.constant dense<0.000000e+00> : vector<200x4xf32>
    %9 = tpu.matmul %8, %3, %cst_11 {dimension_numbers = #tpu.dot_dimension_numbers<[1], [0], [0], [1], [0, 0, 1, 1], [], []>} : vector<200x256xf32>, vector<256x4xf32>, vector<200x4xf32> -> vector<200x4xf32>
    %10 = vector.extract_strided_slice %6 {offsets = [0, 0], sizes = [25, 16], strides = [1, 1]} : vector<200x16xf32> to vector<25x16xf32>
    %cst_12 = arith.constant dense<0xFF800000> : vector<16xf32>
    %11 = vector.multi_reduction <maximumf>, %10, %cst_12 [0] : vector<25x16xf32> to vector<16xf32>
    %12 = vector.shape_cast %11 : vector<16xf32> to vector<1x16xf32>
    %13 = vector.extract_strided_slice %6 {offsets = [25, 0], sizes = [25, 16], strides = [1, 1]} : vector<200x16xf32> to vector<25x16xf32>
    %cst_13 = arith.constant dense<0xFF800000> : vector<16xf32>
    %14 = vector.multi_reduction <maximumf>, %13, %cst_13 [0] : vector<25x16xf32> to vector<16xf32>
    %15 = vector.shape_cast %14 : vector<16xf32> to vector<1x16xf32>
    %16 = vector.extract_strided_slice %6 {offsets = [50, 0], sizes = [25, 16], strides = [1, 1]} : vector<200x16xf32> to vector<25x16xf32>
    %cst_14 = arith.constant dense<0xFF800000> : vector<16xf32>
    %17 = vector.multi_reduction <maximumf>, %16, %cst_14 [0] : vector<25x16xf32> to vector<16xf32>
    %18 = vector.shape_cast %17 : vector<16xf32> to vector<1x16xf32>
    %19 = vector.extract_strided_slice %6 {offsets = [75, 0], sizes = [25, 16], strides = [1, 1]} : vector<200x16xf32> to vector<25x16xf32>
    %cst_15 = arith.constant dense<0xFF800000> : vector<16xf32>
    %20 = vector.multi_reduction <maximumf>, %19, %cst_15 [0] : vector<25x16xf32> to vector<16xf32>
    %21 = vector.shape_cast %20 : vector<16xf32> to vector<1x16xf32>
    %22 = vector.extract_strided_slice %6 {offsets = [100, 0], sizes = [25, 16], strides = [1, 1]} : vector<200x16xf32> to vector<25x16xf32>
    %cst_16 = arith.constant dense<0xFF800000> : vector<16xf32>
    %23 = vector.multi_reduction <maximumf>, %22, %cst_16 [0] : vector<25x16xf32> to vector<16xf32>
    %24 = vector.shape_cast %23 : vector<16xf32> to vector<1x16xf32>
    %25 = vector.extract_strided_slice %6 {offsets = [125, 0], sizes = [25, 16], strides = [1, 1]} : vector<200x16xf32> to vector<25x16xf32>
    %cst_17 = arith.constant dense<0xFF800000> : vector<16xf32>
    %26 = vector.multi_reduction <maximumf>, %25, %cst_17 [0] : vector<25x16xf32> to vector<16xf32>
    %27 = vector.shape_cast %26 : vector<16xf32> to vector<1x16xf32>
    %28 = vector.extract_strided_slice %6 {offsets = [150, 0], sizes = [25, 16], strides = [1, 1]} : vector<200x16xf32> to vector<25x16xf32>
    %cst_18 = arith.constant dense<0xFF800000> : vector<16xf32>
    %29 = vector.multi_reduction <maximumf>, %28, %cst_18 [0] : vector<25x16xf32> to vector<16xf32>
    %30 = vector.shape_cast %29 : vector<16xf32> to vector<1x16xf32>
    %31 = vector.extract_strided_slice %6 {offsets = [175, 0], sizes = [25, 16], strides = [1, 1]} : vector<200x16xf32> to vector<25x16xf32>
    %cst_19 = arith.constant dense<0xFF800000> : vector<16xf32>
    %32 = vector.multi_reduction <maximumf>, %31, %cst_19 [0] : vector<25x16xf32> to vector<16xf32>
    %33 = vector.shape_cast %32 : vector<16xf32> to vector<1x16xf32>
    %34 = tpu.concatenate %12, %15, %18, %21, %24, %27, %30, %33 in 0 : vector<1x16xf32>, vector<1x16xf32>, vector<1x16xf32>, vector<1x16xf32>, vector<1x16xf32>, vector<1x16xf32>, vector<1x16xf32>, vector<1x16xf32> -> vector<8x16xf32>
    %35 = vector.extract_strided_slice %9 {offsets = [0, 0], sizes = [25, 4], strides = [1, 1]} : vector<200x4xf32> to vector<25x4xf32>
    %cst_20 = arith.constant dense<0xFF800000> : vector<4xf32>
    %36 = vector.multi_reduction <maximumf>, %35, %cst_20 [0] : vector<25x4xf32> to vector<4xf32>
    %37 = vector.shape_cast %36 : vector<4xf32> to vector<1x4xf32>
    %38 = vector.extract_strided_slice %9 {offsets = [25, 0], sizes = [25, 4], strides = [1, 1]} : vector<200x4xf32> to vector<25x4xf32>
    %cst_21 = arith.constant dense<0xFF800000> : vector<4xf32>
    %39 = vector.multi_reduction <maximumf>, %38, %cst_21 [0] : vector<25x4xf32> to vector<4xf32>
    %40 = vector.shape_cast %39 : vector<4xf32> to vector<1x4xf32>
    %41 = vector.extract_strided_slice %9 {offsets = [50, 0], sizes = [25, 4], strides = [1, 1]} : vector<200x4xf32> to vector<25x4xf32>
    %cst_22 = arith.constant dense<0xFF800000> : vector<4xf32>
    %42 = vector.multi_reduction <maximumf>, %41, %cst_22 [0] : vector<25x4xf32> to vector<4xf32>
    %43 = vector.shape_cast %42 : vector<4xf32> to vector<1x4xf32>
    %44 = vector.extract_strided_slice %9 {offsets = [75, 0], sizes = [25, 4], strides = [1, 1]} : vector<200x4xf32> to vector<25x4xf32>
    %cst_23 = arith.constant dense<0xFF800000> : vector<4xf32>
    %45 = vector.multi_reduction <maximumf>, %44, %cst_23 [0] : vector<25x4xf32> to vector<4xf32>
    %46 = vector.shape_cast %45 : vector<4xf32> to vector<1x4xf32>
    %47 = vector.extract_strided_slice %9 {offsets = [100, 0], sizes = [25, 4], strides = [1, 1]} : vector<200x4xf32> to vector<25x4xf32>
    %cst_24 = arith.constant dense<0xFF800000> : vector<4xf32>
    %48 = vector.multi_reduction <maximumf>, %47, %cst_24 [0] : vector<25x4xf32> to vector<4xf32>
    %49 = vector.shape_cast %48 : vector<4xf32> to vector<1x4xf32>
    %50 = vector.extract_strided_slice %9 {offsets = [125, 0], sizes = [25, 4], strides = [1, 1]} : vector<200x4xf32> to vector<25x4xf32>
    %cst_25 = arith.constant dense<0xFF800000> : vector<4xf32>
    %51 = vector.multi_reduction <maximumf>, %50, %cst_25 [0] : vector<25x4xf32> to vector<4xf32>
    %52 = vector.shape_cast %51 : vector<4xf32> to vector<1x4xf32>
    %53 = vector.extract_strided_slice %9 {offsets = [150, 0], sizes = [25, 4], strides = [1, 1]} : vector<200x4xf32> to vector<25x4xf32>
    %cst_26 = arith.constant dense<0xFF800000> : vector<4xf32>
    %54 = vector.multi_reduction <maximumf>, %53, %cst_26 [0] : vector<25x4xf32> to vector<4xf32>
    %55 = vector.shape_cast %54 : vector<4xf32> to vector<1x4xf32>
    %56 = vector.extract_strided_slice %9 {offsets = [175, 0], sizes = [25, 4], strides = [1, 1]} : vector<200x4xf32> to vector<25x4xf32>
    %cst_27 = arith.constant dense<0xFF800000> : vector<4xf32>
    %57 = vector.multi_reduction <maximumf>, %56, %cst_27 [0] : vector<25x4xf32> to vector<4xf32>
    %58 = vector.shape_cast %57 : vector<4xf32> to vector<1x4xf32>
    %59 = tpu.concatenate %37, %40, %43, %46, %49, %52, %55, %58 in 0 : vector<1x4xf32>, vector<1x4xf32>, vector<1x4xf32>, vector<1x4xf32>, vector<1x4xf32>, vector<1x4xf32>, vector<1x4xf32>, vector<1x4xf32> -> vector<8x4xf32>
    %c0_28 = arith.constant 0 : index
    %c0_29 = arith.constant 0 : index
    %60 = vector.load %arg10[%c0_28, %c0_29] : memref<8x16xf32, #tpu.memory_space<vmem>>, vector<8x16xf32>
    tpu.vector_store %arg10[%c0_28, %c0_29], %34 {strides = array<i32>} : memref<8x16xf32, #tpu.memory_space<vmem>>, vector<8x16xf32>,
    %c0_30 = arith.constant 0 : index
    %c0_31 = arith.constant 0 : index
    %61 = vector.load %arg11[%c0_30, %c0_31] : memref<8x4xf32, #tpu.memory_space<vmem>>, vector<8x4xf32>
    tpu.vector_store %arg11[%c0_30, %c0_31], %59 {strides = array<i32>} : memref<8x4xf32, #tpu.memory_space<vmem>>, vector<8x4xf32>,
    %c0_32 = arith.constant 0 : index
    %c0_33 = arith.constant 0 : index
    %62 = vector.load %arg6[%c0_32, %c0_33] : memref<16x10xf32, #tpu.memory_space<vmem>>, vector<16x10xf32>
    %cst_34 = arith.constant dense<0.000000e+00> : vector<8x10xf32>
    %63 = tpu.matmul %34, %62, %cst_34 {dimension_numbers = #tpu.dot_dimension_numbers<[1], [0], [0], [1], [0, 0, 1, 1], [], []>} : vector<8x16xf32>, vector<16x10xf32>, vector<8x10xf32> -> vector<8x10xf32>
    %c0_35 = arith.constant 0 : index
    %c0_36 = arith.constant 0 : index
    %64 = vector.load %arg7[%c0_35, %c0_36] : memref<4x10xf32, #tpu.memory_space<vmem>>, vector<4x10xf32>
    %cst_37 = arith.constant dense<0.000000e+00> : vector<8x10xf32>
    %65 = tpu.matmul %59, %64, %cst_37 {dimension_numbers = #tpu.dot_dimension_numbers<[1], [0], [0], [1], [0, 0, 1, 1], [], []>} : vector<8x4xf32>, vector<4x10xf32>, vector<8x10xf32> -> vector<8x10xf32>
    %66 = arith.addf %63, %65 : vector<8x10xf32>
    %c0_38 = arith.constant 0 : index
    %c0_39 = arith.constant 0 : index
    %67 = vector.load %arg8[%c0_38, %c0_39] : memref<1x10xf32, #tpu.memory_space<vmem>>, vector<1x10xf32>
    %68 = vector.broadcast %67 : vector<1x10xf32> to vector<8x10xf32>
    %69 = arith.addf %66, %68 : vector<8x10xf32>
    %cst_40 = arith.constant dense<0xFF800000> : vector<8xf32>
    %70 = vector.multi_reduction <maximumf>, %69, %cst_40 [1] : vector<8x10xf32> to vector<8xf32>
    %71 = vector.shape_cast %70 : vector<8xf32> to vector<8x1xf32>
    %72 = vector.broadcast %71 : vector<8x1xf32> to vector<8x10xf32>
    %73 = arith.subf %69, %72 : vector<8x10xf32>
    %74 = math.exp %73 : vector<8x10xf32>
    %cst_41 = arith.constant dense<0.000000e+00> : vector<8xf32>
    %75 = vector.multi_reduction <add>, %74, %cst_41 [1] : vector<8x10xf32> to vector<8xf32>
    %76 = vector.shape_cast %75 : vector<8xf32> to vector<8x1xf32>
    %77 = tpu.reciprocal %76 {approx = true} : vector<8x1xf32> -> vector<8x1xf32>
    %78 = arith.mulf %76, %77 : vector<8x1xf32>
    %cst_42 = arith.constant 2.000000e+00 : f32
    %79 = vector.broadcast %cst_42 : f32 to vector<8x1xf32>
    %80 = arith.subf %79, %78 : vector<8x1xf32>
    %81 = arith.mulf %77, %80 : vector<8x1xf32>
    %82 = vector.broadcast %81 : vector<8x1xf32> to vector<8x10xf32>
    %83 = arith.mulf %74, %82 : vector<8x10xf32>
    %c0_43 = arith.constant 0 : index
    %c0_44 = arith.constant 0 : index
    %84 = vector.load %arg9[%c0_43, %c0_44] : memref<8x10xf32, #tpu.memory_space<vmem>>, vector<8x10xf32>
    tpu.vector_store %arg9[%c0_43, %c0_44], %83 {strides = array<i32>} : memref<8x10xf32, #tpu.memory_space<vmem>>, vector<8x10xf32>,
    return
  }
  func.func @transform_0(%arg0: i32, %arg1: memref<3xi32, #tpu.memory_space<smem>>) -> (i32, i32, i32) {
    %0 = arith.index_cast %arg0 : i32 to index
    %1 = memref.load %arg1[%0] : memref<3xi32, #tpu.memory_space<smem>>
    %c0_i32 = arith.constant 0 : i32
    %c0_i32_0 = arith.constant 0 : i32
    %c0_i32_1 = arith.constant 0 : i32
    return %1, %c0_i32, %c0_i32_0 : i32, i32, i32
  }
  func.func @transform_1(%arg0: i32, %arg1: memref<3xi32, #tpu.memory_space<smem>>) -> (i32, i32, i32) {
    %0 = arith.index_cast %arg0 : i32 to index
    %1 = memref.load %arg1[%0] : memref<3xi32, #tpu.memory_space<smem>>
    %c0_i32 = arith.constant 0 : i32
    %c0_i32_0 = arith.constant 0 : i32
    %c0_i32_1 = arith.constant 0 : i32
    return %1, %c0_i32, %c0_i32_0 : i32, i32, i32
  }
  func.func @transform_2(%arg0: i32, %arg1: memref<3xi32, #tpu.memory_space<smem>>) -> (i32, i32, i32) {
    %c0_i32 = arith.constant 0 : i32
    %c0_i32_0 = arith.constant 0 : i32
    %c0_i32_1 = arith.constant 0 : i32
    return %arg0, %c0_i32, %c0_i32_0 : i32, i32, i32
  }
  func.func @transform_3(%arg0: i32, %arg1: memref<3xi32, #tpu.memory_space<smem>>) -> (i32, i32, i32) {
    %c0_i32 = arith.constant 0 : i32
    %c0_i32_0 = arith.constant 0 : i32
    %c0_i32_1 = arith.constant 0 : i32
    return %arg0, %c0_i32, %c0_i32_0 : i32, i32, i32
  }
  func.func @transform_4(%arg0: i32, %arg1: memref<3xi32, #tpu.memory_space<smem>>) -> (i32, i32) {
    %c0_i32 = arith.constant 0 : i32
    %c0_i32_0 = arith.constant 0 : i32
    %c0_i32_1 = arith.constant 0 : i32
    return %c0_i32, %c0_i32_0 : i32, i32
  }
  func.func @transform_5(%arg0: i32, %arg1: memref<3xi32, #tpu.memory_space<smem>>) -> (i32, i32) {
    %c0_i32 = arith.constant 0 : i32
    %c0_i32_0 = arith.constant 0 : i32
    %c0_i32_1 = arith.constant 0 : i32
    return %c0_i32, %c0_i32_0 : i32, i32
  }
  func.func @transform_6(%arg0: i32, %arg1: memref<3xi32, #tpu.memory_space<smem>>) -> (i32, i32) {
    %c0_i32 = arith.constant 0 : i32
    %c0_i32_0 = arith.constant 0 : i32
    %c0_i32_1 = arith.constant 0 : i32
    return %c0_i32, %c0_i32_0 : i32, i32
  }
  func.func @transform_7(%arg0: i32, %arg1: memref<3xi32, #tpu.memory_space<smem>>) -> (i32, i32) {
    %c0_i32 = arith.constant 0 : i32
    %c0_i32_0 = arith.constant 0 : i32
    return %arg0, %c0_i32 : i32, i32
  }
  func.func @transform_8(%arg0: i32, %arg1: memref<3xi32, #tpu.memory_space<smem>>) -> (i32, i32) {
    %c0_i32 = arith.constant 0 : i32
    %c0_i32_0 = arith.constant 0 : i32
    return %arg0, %c0_i32 : i32, i32
  }
  func.func @transform_9(%arg0: i32, %arg1: memref<3xi32, #tpu.memory_space<smem>>) -> (i32, i32) {
    %c0_i32 = arith.constant 0 : i32
    %c0_i32_0 = arith.constant 0 : i32
    return %arg0, %c0_i32 : i32, i32
  }
}

</mosaic_0001>

<llo_original>
// kernel: resnet_mod_roi_head_forward.1
$region0: #{resnet_mod_roi_head_forward.1}
  #allocation0 [shape = 'u32[]', space=smem, size = 0x4, offset = 0x4, fixed_abs, tag = 'smem constant byte address 0x4 - core index']
  #allocation1 [shape = 'u32[144,128]{1,0:T(1,128)}', space=vmem, size = 0x12000, scoped, tag = 'internal scratch']
  #allocation2 [shape = 's32[1]{0}', space=sflag, size = 0x4, scoped, tag = 'scoped memory for resnet_mod_roi_head_forward.1']
  #allocation3 [shape = 'u8[512]{0}', space=smem, size = 0x200, scoped, tag = 'prefetched SMEM operand 0']
  %s0 = inlined_call_operand.vmem [shape: s32[3], index: 0, kind: input, shape index: {}]
  %s1 = inlined_call_operand.vmem [shape: f32[2,256,16], index: 1, kind: input, shape index: {}]
  %s2 = inlined_call_operand.vmem [shape: f32[2,256,4], index: 2, kind: input, shape index: {}]
  %s3 = inlined_call_operand.vmem [shape: f32[3,200,256], index: 3, kind: input, shape index: {}, may-alias: {3,4}]
  %s4 = inlined_call_operand.vmem [shape: f32[3,200,256], index: 4, kind: input, shape index: {}, may-alias: {3,4}]
  %s5 = inlined_call_operand.vmem [shape: f32[16,10], index: 5, kind: input, shape index: {}]
  %s6 = inlined_call_operand.vmem [shape: f32[4,10], index: 6, kind: input, shape index: {}]
  %s7 = inlined_call_operand.vmem [shape: f32[1,10], index: 7, kind: input, shape index: {}]
  %s8 = inlined_call_operand.vmem [shape: f32[24,10], index: 8, kind: output, shape index: {0}]
  %s9 = inlined_call_operand.vmem [shape: f32[24,16], index: 9, kind: output, shape index: {1}]
  %s10 = inlined_call_operand.vmem [shape: f32[24,4], index: 10, kind: output, shape index: {2}]
  %11 = xla_tuple %s8, %s9, %s10
  %s12 = sld [smem:[#allocation0]]
  $region77: #{resnet_mod_roi_head_forward.1} parent=0
    _
  %s14 = ssub.s32 1, %s12
  %s15 = scalar_select 0, %s14, %s12
  %s16 = sshll.u32 %s0, 4
  %s17 = int_to_ptr.vmem [resolvable:$true] %s16
  %19 = dma.vmem_to_smem %s17, 16, [#allocation3], [#allocation2]
  %20 = dma.done [#allocation2], 16
  %21 = sfence
  loop: start=0, step=1, limit=5
  $region2: #{resnet_mod_roi_head_forward.1} parent=0 // loop_pre_header
    _
  $region3: #{resnet_mod_roi_head_forward.1} parent=0 // loop_header
    %s23 = sphi 0, %s27
    %p24 = scmp.ge.s32.totalorder %s23, 5
    %s35 = sphi 0, %s37
    %s38 = sphi 0, %s35
    %s39 = sphi 0, %s38
    %s55 = sphi 0, %s39
    %s63 = sphi 0, %s65
    %s66 = sphi 0, %s63
    %s67 = sphi 0, %s66
    %s83 = sphi 0, %s67
    %s89 = sphi 0, %s91
    %s92 = sphi 0, %s89
    %s93 = sphi 0, %s92
    %s109 = sphi 0, %s93
    %s115 = sphi 0, %s117
    %s118 = sphi 0, %s115
    %s119 = sphi 0, %s118
    %s135 = sphi 0, %s119
    %s139 = sphi 0, %s139
    %s141 = sphi 0, %s139
    %s142 = sphi 0, %s141
    %s156 = sphi 0, %s142
    %s160 = sphi 0, %s160
    %s162 = sphi 0, %s160
    %s163 = sphi 0, %s162
    %s177 = sphi 0, %s163
    %s181 = sphi 0, %s181
    %s183 = sphi 0, %s181
    %s184 = sphi 0, %s183
    %s198 = sphi 0, %s184
    %s204 = sphi 0, %s206
    %s207 = sphi 0, %s204
    %s208 = sphi 0, %s207
    %s224 = sphi 0, %s208
    %s230 = sphi 0, %s232
    %s233 = sphi 0, %s230
    %s234 = sphi 0, %s233
    %s250 = sphi 0, %s234
    %s256 = sphi 0, %s258
    %s259 = sphi 0, %s256
    %s260 = sphi 0, %s259
    %s276 = sphi 0, %s260
  $region4: #{resnet_mod_roi_head_forward.1} parent=0 // loop_header_branch
    %26 = sbr.rel (%p24) target = $region8
  $region5: #{resnet_mod_roi_head_forward.1} parent=0 // loop_body
    %s28 = ssub.s32 %s23, 1
    %s29 = ssub.s32 %s23, 2
    %s30 = sadd.s32 %s23, 1
    %s31 = sld [smem:[#allocation3 + %s23]]
    %s32 = sld [smem:[#allocation3 + %s30]]
    %s33 = ssub.s32 %s31, %s32
    %p34 = scmp.eq.s32.totalorder %s33, 0
    %s36 = sadd.s32 %s35, 1
    %s37 = scalar_select %p34, %s35, %s36
    %p40 = pneg %p34
    %p41 = scmp.eq.s32.totalorder %s23, 2
    %p42 = por %p40, %p41
    %p43 = scmp.ne.s32.totalorder %s35, %s38
    %p44 = scmp.eq.s32.totalorder %s23, 0
    %p45 = por %p43, %p44
    %p46 = scmp.ne.s32.totalorder %s35, %s38
    %p47 = scmp.eq.s32.totalorder %s28, 2
    %p48 = por %p46, %p47
    %p49 = scmp.ne.s32.totalorder %s38, %s39
    %p50 = scmp.eq.s32.totalorder %s28, 0
    %p51 = por %p49, %p50
    %p52 = scmp.ne.s32.totalorder %s38, %s39
    %p53 = scmp.eq.s32.totalorder %s29, 2
    %p54 = por %p52, %p53
    %p56 = scmp.ne.s32.totalorder %s39, %s55
    %p57 = scmp.eq.s32.totalorder %s29, 0
    %p58 = por %p56, %p57
    %s59 = sld [smem:[#allocation3 + %s23]]
    %s60 = sld [smem:[#allocation3 + %s30]]
    %s61 = ssub.s32 %s59, %s60
    %p62 = scmp.eq.s32.totalorder %s61, 0
    %s64 = sadd.s32 %s63, 1
    %s65 = scalar_select %p62, %s63, %s64
    %p68 = pneg %p62
    %p69 = scmp.eq.s32.totalorder %s23, 2
    %p70 = por %p68, %p69
    %p71 = scmp.ne.s32.totalorder %s63, %s66
    %p72 = scmp.eq.s32.totalorder %s23, 0
    %p73 = por %p71, %p72
    %p74 = scmp.ne.s32.totalorder %s63, %s66
    %p75 = scmp.eq.s32.totalorder %s28, 2
    %p76 = por %p74, %p75
    %p77 = scmp.ne.s32.totalorder %s66, %s67
    %p78 = scmp.eq.s32.totalorder %s28, 0
    %p79 = por %p77, %p78
    %p80 = scmp.ne.s32.totalorder %s66, %s67
    %p81 = scmp.eq.s32.totalorder %s29, 2
    %p82 = por %p80, %p81
    %p84 = scmp.ne.s32.totalorder %s67, %s83
    %p85 = scmp.eq.s32.totalorder %s29, 0
    %p86 = por %p84, %p85
    %s87 = ssub.s32 %s23, %s30
    %p88 = scmp.eq.s32.totalorder %s87, 0
    %s90 = sadd.s32 %s89, 1
    %s91 = scalar_select %p88, %s89, %s90
    %p94 = pneg %p88
    %p95 = scmp.eq.s32.totalorder %s23, 2
    %p96 = por %p94, %p95
    %p97 = scmp.ne.s32.totalorder %s89, %s92
    %p98 = scmp.eq.s32.totalorder %s23, 0
    %p99 = por %p97, %p98
    %p100 = scmp.ne.s32.totalorder %s89, %s92
    %p101 = scmp.eq.s32.totalorder %s28, 2
    %p102 = por %p100, %p101
    %p103 = scmp.ne.s32.totalorder %s92, %s93
    %p104 = scmp.eq.s32.totalorder %s28, 0
    %p105 = por %p103, %p104
    %p106 = scmp.ne.s32.totalorder %s92, %s93
    %p107 = scmp.eq.s32.totalorder %s29, 2
    %p108 = por %p106, %p107
    %p110 = scmp.ne.s32.totalorder %s93, %s109
    %p111 = scmp.eq.s32.totalorder %s29, 0
    %p112 = por %p110, %p111
    %s113 = ssub.s32 %s23, %s30
    %p114 = scmp.eq.s32.totalorder %s113, 0
    %s116 = sadd.s32 %s115, 1
    %s117 = scalar_select %p114, %s115, %s116
    %p120 = pneg %p114
    %p121 = scmp.eq.s32.totalorder %s23, 2
    %p122 = por %p120, %p121
    %p123 = scmp.ne.s32.totalorder %s115, %s118
    %p124 = scmp.eq.s32.totalorder %s23, 0
    %p125 = por %p123, %p124
    %p126 = scmp.ne.s32.totalorder %s115, %s118
    %p127 = scmp.eq.s32.totalorder %s28, 2
    %p128 = por %p126, %p127
    %p129 = scmp.ne.s32.totalorder %s118, %s119
    %p130 = scmp.eq.s32.totalorder %s28, 0
    %p131 = por %p129, %p130
    %p132 = scmp.ne.s32.totalorder %s118, %s119
    %p133 = scmp.eq.s32.totalorder %s29, 2
    %p134 = por %p132, %p133
    %p136 = scmp.ne.s32.totalorder %s119, %s135
    %p137 = scmp.eq.s32.totalorder %s29, 0
    %p138 = por %p136, %p137
    %s140 = sadd.s32 %s139, 1
    %p143 = scmp.eq.s32.totalorder %s23, 2
    %p144 = scmp.ne.s32.totalorder %s139, %s141
    %p145 = scmp.eq.s32.totalorder %s23, 0
    %p146 = por %p144, %p145
    %p147 = scmp.ne.s32.totalorder %s139, %s141
    %p148 = scmp.eq.s32.totalorder %s28, 2
    %p149 = por %p147, %p148
    %p150 = scmp.ne.s32.totalorder %s141, %s142
    %p151 = scmp.eq.s32.totalorder %s28, 0
    %p152 = por %p150, %p151
    %p153 = scmp.ne.s32.totalorder %s141, %s142
    %p154 = scmp.eq.s32.totalorder %s29, 2
    %p155 = por %p153, %p154
    %p157 = scmp.ne.s32.totalorder %s142, %s156
    %p158 = scmp.eq.s32.totalorder %s29, 0
    %p159 = por %p157, %p158
    %s161 = sadd.s32 %s160, 1
    %p164 = scmp.eq.s32.totalorder %s23, 2
    %p165 = scmp.ne.s32.totalorder %s160, %s162
    %p166 = scmp.eq.s32.totalorder %s23, 0
    %p167 = por %p165, %p166
    %p168 = scmp.ne.s32.totalorder %s160, %s162
    %p169 = scmp.eq.s32.totalorder %s28, 2
    %p170 = por %p168, %p169
    %p171 = scmp.ne.s32.totalorder %s162, %s163
    %p172 = scmp.eq.s32.totalorder %s28, 0
    %p173 = por %p171, %p172
    %p174 = scmp.ne.s32.totalorder %s162, %s163
    %p175 = scmp.eq.s32.totalorder %s29, 2
    %p176 = por %p174, %p175
    %p178 = scmp.ne.s32.totalorder %s163, %s177
    %p179 = scmp.eq.s32.totalorder %s29, 0
    %p180 = por %p178, %p179
    %s182 = sadd.s32 %s181, 1
    %p185 = scmp.eq.s32.totalorder %s23, 2
    %p186 = scmp.ne.s32.totalorder %s181, %s183
    %p187 = scmp.eq.s32.totalorder %s23, 0
    %p188 = por %p186, %p187
    %p189 = scmp.ne.s32.totalorder %s181, %s183
    %p190 = scmp.eq.s32.totalorder %s28, 2
    %p191 = por %p189, %p190
    %p192 = scmp.ne.s32.totalorder %s183, %s184
    %p193 = scmp.eq.s32.totalorder %s28, 0
    %p194 = por %p192, %p193
    %p195 = scmp.ne.s32.totalorder %s183, %s184
    %p196 = scmp.eq.s32.totalorder %s29, 2
    %p197 = por %p195, %p196
    %p199 = scmp.ne.s32.totalorder %s184, %s198
    %p200 = scmp.eq.s32.totalorder %s29, 0
    %p201 = por %p199, %p200
    %s202 = ssub.s32 %s23, %s30
    %p203 = scmp.eq.s32.totalorder %s202, 0
    %s205 = sadd.s32 %s204, 1
    %s206 = scalar_select %p203, %s204, %s205
    %p209 = pneg %p203
    %p210 = scmp.eq.s32.totalorder %s23, 2
    %p211 = por %p209, %p210
    %p212 = scmp.ne.s32.totalorder %s204, %s207
    %p213 = scmp.eq.s32.totalorder %s23, 0
    %p214 = por %p212, %p213
    %p215 = scmp.ne.s32.totalorder %s204, %s207
    %p216 = scmp.eq.s32.totalorder %s28, 2
    %p217 = por %p215, %p216
    %p218 = scmp.ne.s32.totalorder %s207, %s208
    %p219 = scmp.eq.s32.totalorder %s28, 0
    %p220 = por %p218, %p219
    %p221 = scmp.ne.s32.totalorder %s207, %s208
    %p222 = scmp.eq.s32.totalorder %s29, 2
    %p223 = por %p221, %p222
    %p225 = scmp.ne.s32.totalorder %s208, %s224
    %p226 = scmp.eq.s32.totalorder %s29, 0
    %p227 = por %p225, %p226
    %s228 = ssub.s32 %s23, %s30
    %p229 = scmp.eq.s32.totalorder %s228, 0
    %s231 = sadd.s32 %s230, 1
    %s232 = scalar_select %p229, %s230, %s231
    %p235 = pneg %p229
    %p236 = scmp.eq.s32.totalorder %s23, 2
    %p237 = por %p235, %p236
    %p238 = scmp.ne.s32.totalorder %s230, %s233
    %p239 = scmp.eq.s32.totalorder %s23, 0
    %p240 = por %p238, %p239
    %p241 = scmp.ne.s32.totalorder %s230, %s233
    %p242 = scmp.eq.s32.totalorder %s28, 2
    %p243 = por %p241, %p242
    %p244 = scmp.ne.s32.totalorder %s233, %s234
    %p245 = scmp.eq.s32.totalorder %s28, 0
    %p246 = por %p244, %p245
    %p247 = scmp.ne.s32.totalorder %s233, %s234
    %p248 = scmp.eq.s32.totalorder %s29, 2
    %p249 = por %p247, %p248
    %p251 = scmp.ne.s32.totalorder %s234, %s250
    %p252 = scmp.eq.s32.totalorder %s29, 0
    %p253 = por %p251, %p252
    %s254 = ssub.s32 %s23, %s30
    %p255 = scmp.eq.s32.totalorder %s254, 0
    %s257 = sadd.s32 %s256, 1
    %s258 = scalar_select %p255, %s256, %s257
    %p261 = pneg %p255
    %p262 = scmp.eq.s32.totalorder %s23, 2
    %p263 = por %p261, %p262
    %p264 = scmp.ne.s32.totalorder %s256, %s259
    %p265 = scmp.eq.s32.totalorder %s23, 0
    %p266 = por %p264, %p265
    %p267 = scmp.ne.s32.totalorder %s256, %s259
    %p268 = scmp.eq.s32.totalorder %s28, 2
    %p269 = por %p267, %p268
    %p270 = scmp.ne.s32.totalorder %s259, %s260
    %p271 = scmp.eq.s32.totalorder %s28, 0
    %p272 = por %p270, %p271
    %p273 = scmp.ne.s32.totalorder %s259, %s260
    %p274 = scmp.eq.s32.totalorder %s29, 2
    %p275 = por %p273, %p274
    %p277 = scmp.ne.s32.totalorder %s260, %s276
    %p278 = scmp.eq.s32.totalorder %s29, 0
    %p279 = por %p277, %p278
    %p280 = scmp.le.s32.totalorder 1, %s23
    %p281 = scmp.lt.s32.totalorder %s23, 4
    %p282 = pnand %p280, %p281
    %p283 = pneg %p282
    // Predicated region
    $region9: #{resnet_mod_roi_head_forward.1} parent=5 // pred_check
      _
    $region10: #{resnet_mod_roi_head_forward.1} parent=5 // pred_check_branch
      %285 = sbr.rel (%p282) target = $region12
    $region11: #{resnet_mod_roi_head_forward.1} parent=5 // pred_region
      %s286 = ssub.s32 %s23, 1
      // Predicated region
      $region13: #{resnet_mod_roi_head_forward.1} parent=11 // pred_check
        %p287 = pneg %p152
      $region14: #{resnet_mod_roi_head_forward.1} parent=11 // pred_check_branch
        %289 = sbr.rel (%p287) target = $region16
      $region15: #{resnet_mod_roi_head_forward.1} parent=11 // pred_region
        _
      $region16: #{resnet_mod_roi_head_forward.1} parent=11 // pred_fallthru
        _
      // Predicated region
      $region17: #{resnet_mod_roi_head_forward.1} parent=11 // pred_check
        %p290 = pneg %p173
      $region18: #{resnet_mod_roi_head_forward.1} parent=11 // pred_check_branch
        %292 = sbr.rel (%p290) target = $region20
      $region19: #{resnet_mod_roi_head_forward.1} parent=11 // pred_region
        _
      $region20: #{resnet_mod_roi_head_forward.1} parent=11 // pred_fallthru
        _
      // Predicated region
      $region21: #{resnet_mod_roi_head_forward.1} parent=11 // pred_check
        %p293 = pneg %p194
      $region22: #{resnet_mod_roi_head_forward.1} parent=11 // pred_check_branch
        %295 = sbr.rel (%p293) target = $region24
      $region23: #{resnet_mod_roi_head_forward.1} parent=11 // pred_region
        _
      $region24: #{resnet_mod_roi_head_forward.1} parent=11 // pred_fallthru
        _
    $region12: #{resnet_mod_roi_head_forward.1} parent=5 // pred_fallthru
      _
    %p296 = scmp.lt.s32.totalorder %s23, 3
    // Predicated region
    $region25: #{resnet_mod_roi_head_forward.1} parent=5 // pred_check
      %p297 = pneg %p296
    $region26: #{resnet_mod_roi_head_forward.1} parent=5 // pred_check_branch
      %299 = sbr.rel (%p297) target = $region28
    $region27: #{resnet_mod_roi_head_forward.1} parent=5 // pred_region
      // Predicated region
      $region29: #{resnet_mod_roi_head_forward.1} parent=27 // pred_check
        %p300 = pneg %p45
      $region30: #{resnet_mod_roi_head_forward.1} parent=27 // pred_check_branch
        %302 = sbr.rel (%p300) target = $region32
      $region31: #{resnet_mod_roi_head_forward.1} parent=27 // pred_region
        %s303 = sld [smem:[#allocation3 + %s23]]
        %p304 = scmp.lt.s32.totalorder %s303, 1
        %s305 = scalar_select %p304, %s303, 1
        %s306 = smul.addr %s305, 32
        %s307 = smul.addr %s306, 8
        %s308 = scalar_lea.vmem %s1, %s307
        %s309 = sld [smem:[#allocation3 + %s23]]
      $region32: #{resnet_mod_roi_head_forward.1} parent=27 // pred_fallthru
        _
      // Predicated region
      $region33: #{resnet_mod_roi_head_forward.1} parent=27 // pred_check
        %p310 = pneg %p73
      $region34: #{resnet_mod_roi_head_forward.1} parent=27 // pred_check_branch
        %312 = sbr.rel (%p310) target = $region36
      $region35: #{resnet_mod_roi_head_forward.1} parent=27 // pred_region
        %s313 = sld [smem:[#allocation3 + %s23]]
        %p314 = scmp.lt.s32.totalorder %s313, 1
        %s315 = scalar_select %p314, %s313, 1
        %s316 = smul.addr %s315, 32
        %s317 = smul.addr %s316, 8
        %s318 = scalar_lea.vmem %s2, %s317
        %s319 = sld [smem:[#allocation3 + %s23]]
      $region36: #{resnet_mod_roi_head_forward.1} parent=27 // pred_fallthru
        _
      // Predicated region
      $region37: #{resnet_mod_roi_head_forward.1} parent=27 // pred_check
        %p320 = pneg %p99
      $region38: #{resnet_mod_roi_head_forward.1} parent=27 // pred_check_branch
        %322 = sbr.rel (%p320) target = $region40
      $region39: #{resnet_mod_roi_head_forward.1} parent=27 // pred_region
        %p323 = scmp.lt.s32.totalorder %s23, 2
        %s324 = scalar_select %p323, %s23, 2
        %s325 = smul.addr %s324, 50
        %s326 = smul.addr %s325, 8
        %s327 = scalar_lea.vmem %s3, %s326
      $region40: #{resnet_mod_roi_head_forward.1} parent=27 // pred_fallthru
        _
      // Predicated region
      $region41: #{resnet_mod_roi_head_forward.1} parent=27 // pred_check
        %p328 = pneg %p125
      $region42: #{resnet_mod_roi_head_forward.1} parent=27 // pred_check_branch
        %330 = sbr.rel (%p328) target = $region44
      $region43: #{resnet_mod_roi_head_forward.1} parent=27 // pred_region
        %p331 = scmp.lt.s32.totalorder %s23, 2
        %s332 = scalar_select %p331, %s23, 2
        %s333 = smul.addr %s332, 50
        %s334 = smul.addr %s333, 8
        %s335 = scalar_lea.vmem %s4, %s334
      $region44: #{resnet_mod_roi_head_forward.1} parent=27 // pred_fallthru
        _
    $region28: #{resnet_mod_roi_head_forward.1} parent=5 // pred_fallthru
      _
    %p336 = scmp.le.s32.totalorder 1, %s23
    %p337 = scmp.lt.s32.totalorder %s23, 4
    %p338 = pnand %p336, %p337
    %p339 = pneg %p338
    // Predicated region
    $region45: #{resnet_mod_roi_head_forward.1} parent=5 // pred_check
      _
    $region46: #{resnet_mod_roi_head_forward.1} parent=5 // pred_check_branch
      %341 = sbr.rel (%p338) target = $region48
    $region47: #{resnet_mod_roi_head_forward.1} parent=5 // pred_region
      %s342 = ssub.s32 %s23, 1
      %s343 = sld [smem:[#allocation3 + %s28]]
      %p344 = scmp.lt.s32.totalorder %s343, 1
      %s345 = scalar_select %p344, %s343, 1
      %s346 = smul.addr %s345, 32
      %s347 = smul.addr %s346, 8
      %s348 = scalar_lea.vmem %s1, %s347
      %p349 = pneg %p51
      %p350 = pneg %p48
      %s351 = sld [smem:[#allocation3 + %s28]]
      %p352 = scmp.lt.s32.totalorder %s351, 1
      %s353 = scalar_select %p352, %s351, 1
      %s354 = smul.addr %s353, 32
      %s355 = smul.addr %s354, 8
      %s356 = scalar_lea.vmem %s2, %s355
      %p357 = pneg %p79
      %p358 = pneg %p76
      %p359 = scmp.lt.s32.totalorder %s28, 2
      %s360 = scalar_select %p359, %s28, 2
      %s361 = smul.addr %s360, 50
      %s362 = smul.addr %s361, 8
      %s363 = scalar_lea.vmem %s3, %s362
      %p364 = pneg %p105
      %p365 = pneg %p102
      %p366 = scmp.lt.s32.totalorder %s28, 2
      %s367 = scalar_select %p366, %s28, 2
      %s368 = smul.addr %s367, 50
      %s369 = smul.addr %s368, 8
      %s370 = scalar_lea.vmem %s4, %s369
      %p371 = pneg %p131
      %p372 = pneg %p128
      %p373 = pneg %p152
      %p374 = pneg %p149
      %p375 = pneg %p173
      %p376 = pneg %p170
      %p377 = pneg %p194
      %p378 = pneg %p191
      %p379 = pneg %p220
      %p380 = pneg %p217
      %p381 = scmp.lt.s32.totalorder %s28, 2
      %s382 = scalar_select %p381, %s28, 2
      %s383 = smul.addr %s382, 8
      %s384 = scalar_lea.vmem %s8, %s383
      %p385 = pneg %p246
      %p386 = pneg %p243
      %p387 = scmp.lt.s32.totalorder %s28, 2
      %s388 = scalar_select %p387, %s28, 2
      %s389 = smul.addr %s388, 8
      %s390 = scalar_lea.vmem %s9, %s389
      %p391 = pneg %p272
      %p392 = pneg %p269
      %p393 = scmp.lt.s32.totalorder %s28, 2
      %s394 = scalar_select %p393, %s28, 2
      %s395 = smul.addr %s394, 8
      %s396 = scalar_lea.vmem %s10, %s395
      %s397 = sld [smem:[#allocation3 + %s28]]
      %p398 = scmp.lt.s32.totalorder %s397, 1
      %s399 = scalar_select %p398, %s397, 1
      %s400 = smul.addr %s399, 32
      %s401 = smul.addr %s400, 8
      %s402 = scalar_lea.vmem %s1, %s401
      %s403 = sld [smem:[#allocation3 + %s28]]
      %s404 = sld [smem:[#allocation3 + %s28]]
      %p405 = scmp.lt.s32.totalorder %s404, 1
      %s406 = scalar_select %p405, %s404, 1
      %s407 = smul.addr %s406, 32
      %s408 = smul.addr %s407, 8
      %s409 = scalar_lea.vmem %s2, %s408
      %s410 = sld [smem:[#allocation3 + %s28]]
      %p411 = scmp.lt.s32.totalorder %s28, 2
      %s412 = scalar_select %p411, %s28, 2
      %s413 = smul.addr %s412, 50
      %s414 = smul.addr %s413, 8
      %s415 = scalar_lea.vmem %s3, %s414
      %p416 = scmp.lt.s32.totalorder %s28, 2
      %s417 = scalar_select %p416, %s28, 2
      %s418 = smul.addr %s417, 50
      %s419 = smul.addr %s418, 8
      %s420 = scalar_lea.vmem %s4, %s419
      %p421 = scmp.lt.s32.totalorder %s28, 2
      %s422 = scalar_select %p421, %s28, 2
      %s423 = smul.addr %s422, 8
      %s424 = scalar_lea.vmem %s8, %s423
      %p425 = scmp.lt.s32.totalorder %s28, 2
      %s426 = scalar_select %p425, %s28, 2
      %s427 = smul.addr %s426, 8
      %s428 = scalar_lea.vmem %s9, %s427
      %p429 = scmp.lt.s32.totalorder %s28, 2
      %s430 = scalar_select %p429, %s28, 2
      %s431 = smul.addr %s430, 8
      %s432 = scalar_lea.vmem %s10, %s431
      %v433 = vld [vmem:[%s402] sm:$0xff]
      %v434 = vld [vmem:[%s402 + $0x8] sm:$0xff]
      %v435 = vld [vmem:[%s402 + $0x10] sm:$0xff]
      %v436 = vld [vmem:[%s402 + $0x18] sm:$0xff]
      %v437 = vld [vmem:[%s402 + $0x20] sm:$0xff]
      %v438 = vld [vmem:[%s402 + $0x28] sm:$0xff]
      %v439 = vld [vmem:[%s402 + $0x30] sm:$0xff]
      %v440 = vld [vmem:[%s402 + $0x38] sm:$0xff]
      %v441 = vld [vmem:[%s402 + $0x40] sm:$0xff]
      %v442 = vld [vmem:[%s402 + $0x48] sm:$0xff]
      %v443 = vld [vmem:[%s402 + $0x50] sm:$0xff]
      %v444 = vld [vmem:[%s402 + $0x58] sm:$0xff]
      %v445 = vld [vmem:[%s402 + $0x60] sm:$0xff]
      %v446 = vld [vmem:[%s402 + $0x68] sm:$0xff]
      %v447 = vld [vmem:[%s402 + $0x70] sm:$0xff]
      %v448 = vld [vmem:[%s402 + $0x78] sm:$0xff]
      %v449 = vld [vmem:[%s402 + $0x80] sm:$0xff]
      %v450 = vld [vmem:[%s402 + $0x88] sm:$0xff]
      %v451 = vld [vmem:[%s402 + $0x90] sm:$0xff]
      %v452 = vld [vmem:[%s402 + $0x98] sm:$0xff]
      %v453 = vld [vmem:[%s402 + $0xa0] sm:$0xff]
      %v454 = vld [vmem:[%s402 + $0xa8] sm:$0xff]
      %v455 = vld [vmem:[%s402 + $0xb0] sm:$0xff]
      %v456 = vld [vmem:[%s402 + $0xb8] sm:$0xff]
      %v457 = vld [vmem:[%s402 + $0xc0] sm:$0xff]
      %v458 = vld [vmem:[%s402 + $0xc8] sm:$0xff]
      %v459 = vld [vmem:[%s402 + $0xd0] sm:$0xff]
      %v460 = vld [vmem:[%s402 + $0xd8] sm:$0xff]
      %v461 = vld [vmem:[%s402 + $0xe0] sm:$0xff]
      %v462 = vld [vmem:[%s402 + $0xe8] sm:$0xff]
      %v463 = vld [vmem:[%s402 + $0xf0] sm:$0xff]
      %v464 = vld [vmem:[%s402 + $0xf8] sm:$0xff]
      %v465 = vld [vmem:[%s409] sm:$0xff]
      %v466 = vld [vmem:[%s409 + $0x8] sm:$0xff]
      %v467 = vld [vmem:[%s409 + $0x10] sm:$0xff]
      %v468 = vld [vmem:[%s409 + $0x18] sm:$0xff]
      %v469 = vld [vmem:[%s409 + $0x20] sm:$0xff]
      %v470 = vld [vmem:[%s409 + $0x28] sm:$0xff]
      %v471 = vld [vmem:[%s409 + $0x30] sm:$0xff]
      %v472 = vld [vmem:[%s409 + $0x38] sm:$0xff]
      %v473 = vld [vmem:[%s409 + $0x40] sm:$0xff]
      %v474 = vld [vmem:[%s409 + $0x48] sm:$0xff]
      %v475 = vld [vmem:[%s409 + $0x50] sm:$0xff]
      %v476 = vld [vmem:[%s409 + $0x58] sm:$0xff]
      %v477 = vld [vmem:[%s409 + $0x60] sm:$0xff]
      %v478 = vld [vmem:[%s409 + $0x68] sm:$0xff]
      %v479 = vld [vmem:[%s409 + $0x70] sm:$0xff]
      %v480 = vld [vmem:[%s409 + $0x78] sm:$0xff]
      %v481 = vld [vmem:[%s409 + $0x80] sm:$0xff]
      %v482 = vld [vmem:[%s409 + $0x88] sm:$0xff]
      %v483 = vld [vmem:[%s409 + $0x90] sm:$0xff]
      %v484 = vld [vmem:[%s409 + $0x98] sm:$0xff]
      %v485 = vld [vmem:[%s409 + $0xa0] sm:$0xff]
      %v486 = vld [vmem:[%s409 + $0xa8] sm:$0xff]
      %v487 = vld [vmem:[%s409 + $0xb0] sm:$0xff]
      %v488 = vld [vmem:[%s409 + $0xb8] sm:$0xff]
      %v489 = vld [vmem:[%s409 + $0xc0] sm:$0xff]
      %v490 = vld [vmem:[%s409 + $0xc8] sm:$0xff]
      %v491 = vld [vmem:[%s409 + $0xd0] sm:$0xff]
      %v492 = vld [vmem:[%s409 + $0xd8] sm:$0xff]
      %v493 = vld [vmem:[%s409 + $0xe0] sm:$0xff]
      %v494 = vld [vmem:[%s409 + $0xe8] sm:$0xff]
      %v495 = vld [vmem:[%s409 + $0xf0] sm:$0xff]
      %v496 = vld [vmem:[%s409 + $0xf8] sm:$0xff]
      %v497 = vld [vmem:[%s415] sm:$0xff]
      %v498 = vld [vmem:[%s415 + $0x8] sm:$0xff]
      %v499 = vld [vmem:[%s415 + $0x10] sm:$0xff]
      %v500 = vld [vmem:[%s415 + $0x18] sm:$0xff]
      %v501 = vld [vmem:[%s415 + $0x20] sm:$0xff]
      %v502 = vld [vmem:[%s415 + $0x28] sm:$0xff]
      %v503 = vld [vmem:[%s415 + $0x30] sm:$0xff]
      %v504 = vld [vmem:[%s415 + $0x38] sm:$0xff]
      %v505 = vld [vmem:[%s415 + $0x40] sm:$0xff]
      %v506 = vld [vmem:[%s415 + $0x48] sm:$0xff]
      %v507 = vld [vmem:[%s415 + $0x50] sm:$0xff]
      %v508 = vld [vmem:[%s415 + $0x58] sm:$0xff]
      %v509 = vld [vmem:[%s415 + $0x60] sm:$0xff]
      %v510 = vld [vmem:[%s415 + $0x68] sm:$0xff]
      %v511 = vld [vmem:[%s415 + $0x70] sm:$0xff]
      %v512 = vld [vmem:[%s415 + $0x78] sm:$0xff]
      %v513 = vld [vmem:[%s415 + $0x80] sm:$0xff]
      %v514 = vld [vmem:[%s415 + $0x88] sm:$0xff]
      %v515 = vld [vmem:[%s415 + $0x90] sm:$0xff]
      %v516 = vld [vmem:[%s415 + $0x98] sm:$0xff]
      %v517 = vld [vmem:[%s415 + $0xa0] sm:$0xff]
      %v518 = vld [vmem:[%s415 + $0xa8] sm:$0xff]
      %v519 = vld [vmem:[%s415 + $0xb0] sm:$0xff]
      %v520 = vld [vmem:[%s415 + $0xb8] sm:$0xff]
      %v521 = vld [vmem:[%s415 + $0xc0] sm:$0xff]
      %v522 = vld [vmem:[%s415 + $0xc8] sm:$0xff]
      %v523 = vld [vmem:[%s415 + $0xd0] sm:$0xff]
      %v524 = vld [vmem:[%s415 + $0xd8] sm:$0xff]
      %v525 = vld [vmem:[%s415 + $0xe0] sm:$0xff]
      %v526 = vld [vmem:[%s415 + $0xe8] sm:$0xff]
      %v527 = vld [vmem:[%s415 + $0xf0] sm:$0xff]
      %v528 = vld [vmem:[%s415 + $0xf8] sm:$0xff]
      %v529 = vld [vmem:[%s415 + $0x100] sm:$0xff]
      %v530 = vld [vmem:[%s415 + $0x108] sm:$0xff]
      %v531 = vld [vmem:[%s415 + $0x110] sm:$0xff]
      %v532 = vld [vmem:[%s415 + $0x118] sm:$0xff]
      %v533 = vld [vmem:[%s415 + $0x120] sm:$0xff]
      %v534 = vld [vmem:[%s415 + $0x128] sm:$0xff]
      %v535 = vld [vmem:[%s415 + $0x130] sm:$0xff]
      %v536 = vld [vmem:[%s415 + $0x138] sm:$0xff]
      %v537 = vld [vmem:[%s415 + $0x140] sm:$0xff]
      %v538 = vld [vmem:[%s415 + $0x148] sm:$0xff]
      %v539 = vld [vmem:[%s415 + $0x150] sm:$0xff]
      %v540 = vld [vmem:[%s415 + $0x158] sm:$0xff]
      %v541 = vld [vmem:[%s415 + $0x160] sm:$0xff]
      %v542 = vld [vmem:[%s415 + $0x168] sm:$0xff]
      %v543 = vld [vmem:[%s415 + $0x170] sm:$0xff]
      %v544 = vld [vmem:[%s415 + $0x178] sm:$0xff]
      %v545 = vld [vmem:[%s415 + $0x180] sm:$0xff]
      %v546 = vld [vmem:[%s415 + $0x188] sm:$0xff]
      %547 = vmatprep.subr.mxu0 0.0
      %548 = vmatpush1.msra.mxu0 %v448
      %549 = vmatprep.subr.mxu0 0.0
      %550 = vmatpush1.msra.mxu0 %v447
      %551 = vmatprep.subr.mxu0 0.0
      %552 = vmatpush1.msra.mxu0 %v446
      %553 = vmatprep.subr.mxu0 0.0
      %554 = vmatpush1.msra.mxu0 %v445
      %555 = vmatprep.subr.mxu0 0.0
      %556 = vmatpush1.msra.mxu0 %v444
      %557 = vmatprep.subr.mxu0 0.0
      %558 = vmatpush1.msra.mxu0 %v443
      %559 = vmatprep.subr.mxu0 0.0
      %560 = vmatpush1.msra.mxu0 %v442
      %561 = vmatprep.subr.mxu0 0.0
      %562 = vmatpush1.msra.mxu0 %v441
      %563 = vmatprep.subr.mxu0 0.0
      %564 = vmatpush1.msra.mxu0 %v440
      %565 = vmatprep.subr.mxu0 0.0
      %566 = vmatpush1.msra.mxu0 %v439
      %567 = vmatprep.subr.mxu0 0.0
      %568 = vmatpush1.msra.mxu0 %v438
      %569 = vmatprep.subr.mxu0 0.0
      %570 = vmatpush1.msra.mxu0 %v437
      %571 = vmatprep.subr.mxu0 0.0
      %572 = vmatpush1.msra.mxu0 %v436
      %573 = vmatprep.subr.mxu0 0.0
      %574 = vmatpush1.msra.mxu0 %v435
      %575 = vmatprep.subr.mxu0 0.0
      %576 = vmatpush1.msra.mxu0 %v434
      %577 = vmatprep.subr.mxu0 0.0
      %578 = vmatpush1.msra.mxu0 %v433
      %579 = vmatprep.subr.mxu0 0.0
      %580 = vmatpush2.msra.mxu0 %v464
      %581 = vmatprep.subr.mxu0 0.0
      %582 = vmatpush2.msra.mxu0 %v463
      %583 = vmatprep.subr.mxu0 0.0
      %584 = vmatpush2.msra.mxu0 %v462
      %585 = vmatprep.subr.mxu0 0.0
      %586 = vmatpush2.msra.mxu0 %v461
      %587 = vmatprep.subr.mxu0 0.0
      %588 = vmatpush2.msra.mxu0 %v460
      %589 = vmatprep.subr.mxu0 0.0
      %590 = vmatpush2.msra.mxu0 %v459
      %591 = vmatprep.subr.mxu0 0.0
      %592 = vmatpush2.msra.mxu0 %v458
      %593 = vmatprep.subr.mxu0 0.0
      %594 = vmatpush2.msra.mxu0 %v457
      %595 = vmatprep.subr.mxu0 0.0
      %596 = vmatpush2.msra.mxu0 %v456
      %597 = vmatprep.subr.mxu0 0.0
      %598 = vmatpush2.msra.mxu0 %v455
      %599 = vmatprep.subr.mxu0 0.0
      %600 = vmatpush2.msra.mxu0 %v454
      %601 = vmatprep.subr.mxu0 0.0
      %602 = vmatpush2.msra.mxu0 %v453
      %603 = vmatprep.subr.mxu0 0.0
      %604 = vmatpush2.msra.mxu0 %v452
      %605 = vmatprep.subr.mxu0 0.0
      %606 = vmatpush2.msra.mxu0 %v451
      %607 = vmatprep.subr.mxu0 0.0
      %608 = vmatpush2.msra.mxu0 %v450
      %609 = vmatprep.subr.mxu0 0.0
      %610 = vmatpush2.msra.mxu0 %v449
      %611 = vmatprep.mubr.f32.mxu0 %v498
      %612 = vmatmul.mubr.f32.gmra.mxu0 %v497
      %v613 = vpop.f32.mrf.mxu0
      %v614 = vadd.f32 0.0, %v613
      %v615 = vpop.f32.mrf.mxu0
      %616 = vmatprep.mubr.f32.mxu0 %v500
      %617 = vmatmul.mubr.f32.gmra.mxu0 %v499
      %v618 = vpop.f32.mrf.mxu0
      %v619 = vadd.f32 0.0, %v618
      %v620 = vpop.f32.mrf.mxu0
      %621 = vmatprep.mubr.f32.mxu0 %v502
      %622 = vmatmul.mubr.f32.gmra.mxu0 %v501
      %v623 = vpop.f32.mrf.mxu0
      %v624 = vadd.f32 0.0, %v623
      %v625 = vpop.f32.mrf.mxu0
      %626 = vmatprep.mubr.f32.mxu0 %v504
      %627 = vmatmul.mubr.f32.gmra.mxu0 %v503
      %v628 = vpop.f32.mrf.mxu0
      %v629 = vadd.f32 0.0, %v628
      %v630 = vpop.f32.mrf.mxu0
      %631 = vmatprep.mubr.f32.mxu0 %v506
      %632 = vmatmul.mubr.f32.gmra.mxu0 %v505
      %v633 = vpop.f32.mrf.mxu0
      %v634 = vadd.f32 0.0, %v633
      %v635 = vpop.f32.mrf.mxu0
      %636 = vmatprep.mubr.f32.mxu0 %v508
      %637 = vmatmul.mubr.f32.gmra.mxu0 %v507
      %v638 = vpop.f32.mrf.mxu0
      %v639 = vadd.f32 0.0, %v638
      %v640 = vpop.f32.mrf.mxu0
      %641 = vmatprep.mubr.f32.mxu0 %v510
      %642 = vmatmul.mubr.f32.gmra.mxu0 %v509
      %v643 = vpop.f32.mrf.mxu0
      %v644 = vadd.f32 0.0, %v643
      %v645 = vpop.f32.mrf.mxu0
      %646 = vmatprep.mubr.f32.mxu0 %v512
      %647 = vmatmul.mubr.f32.gmra.mxu0 %v511
      %v648 = vpop.f32.mrf.mxu0
      %v649 = vadd.f32 0.0, %v648
      %v650 = vpop.f32.mrf.mxu0
      %651 = vmatprep.mubr.f32.mxu0 %v514
      %652 = vmatmul.mubr.f32.gmra.mxu0 %v513
      %v653 = vpop.f32.mrf.mxu0
      %v654 = vadd.f32 0.0, %v653
      %v655 = vpop.f32.mrf.mxu0
      %656 = vmatprep.mubr.f32.mxu0 %v516
      %657 = vmatmul.mubr.f32.gmra.mxu0 %v515
      %v658 = vpop.f32.mrf.mxu0
      %v659 = vadd.f32 0.0, %v658
      %v660 = vpop.f32.mrf.mxu0
      %661 = vmatprep.mubr.f32.mxu0 %v518
      %662 = vmatmul.mubr.f32.gmra.mxu0 %v517
      %v663 = vpop.f32.mrf.mxu0
      %v664 = vadd.f32 0.0, %v663
      %v665 = vpop.f32.mrf.mxu0
      %666 = vmatprep.mubr.f32.mxu0 %v520
      %667 = vmatmul.mubr.f32.gmra.mxu0 %v519
      %v668 = vpop.f32.mrf.mxu0
      %v669 = vadd.f32 0.0, %v668
      %v670 = vpop.f32.mrf.mxu0
      %671 = vmatprep.mubr.f32.mxu0 %v522
      %672 = vmatmul.mubr.f32.gmra.mxu0 %v521
      %v673 = vpop.f32.mrf.mxu0
      %v674 = vadd.f32 0.0, %v673
      %v675 = vpop.f32.mrf.mxu0
      %676 = vmatprep.mubr.f32.mxu0 %v524
      %677 = vmatmul.mubr.f32.gmra.mxu0 %v523
      %v678 = vpop.f32.mrf.mxu0
      %v679 = vadd.f32 0.0, %v678
      %v680 = vpop.f32.mrf.mxu0
      %681 = vmatprep.mubr.f32.mxu0 %v526
      %682 = vmatmul.mubr.f32.gmra.mxu0 %v525
      %v683 = vpop.f32.mrf.mxu0
      %v684 = vadd.f32 0.0, %v683
      %v685 = vpop.f32.mrf.mxu0
      %686 = vmatprep.mubr.f32.mxu0 %v528
      %687 = vmatmul.mubr.f32.gmra.mxu0 %v527
      %v688 = vpop.f32.mrf.mxu0
      %v689 = vadd.f32 0.0, %v688
      %v690 = vpop.f32.mrf.mxu0
      %691 = vmatprep.mubr.f32.mxu0 %v530
      %692 = vmatmul.mubr.f32.gmra.mxu0 %v529
      %v693 = vpop.f32.mrf.mxu0
      %v694 = vadd.f32 0.0, %v693
      %v695 = vpop.f32.mrf.mxu0
      %696 = vmatprep.mubr.f32.mxu0 %v532
      %697 = vmatmul.mubr.f32.gmra.mxu0 %v531
      %v698 = vpop.f32.mrf.mxu0
      %v699 = vadd.f32 0.0, %v698
      %v700 = vpop.f32.mrf.mxu0
      %701 = vmatprep.mubr.f32.mxu0 %v534
      %702 = vmatmul.mubr.f32.gmra.mxu0 %v533
      %v703 = vpop.f32.mrf.mxu0
      %v704 = vadd.f32 0.0, %v703
      %v705 = vpop.f32.mrf.mxu0
      %706 = vmatprep.mubr.f32.mxu0 %v536
      %707 = vmatmul.mubr.f32.gmra.mxu0 %v535
      %v708 = vpop.f32.mrf.mxu0
      %v709 = vadd.f32 0.0, %v708
      %v710 = vpop.f32.mrf.mxu0
      %711 = vmatprep.mubr.f32.mxu0 %v538
      %712 = vmatmul.mubr.f32.gmra.mxu0 %v537
      %v713 = vpop.f32.mrf.mxu0
      %v714 = vadd.f32 0.0, %v713
      %v715 = vpop.f32.mrf.mxu0
      %716 = vmatprep.mubr.f32.mxu0 %v540
      %717 = vmatmul.mubr.f32.gmra.mxu0 %v539
      %v718 = vpop.f32.mrf.mxu0
      %v719 = vadd.f32 0.0, %v718
      %v720 = vpop.f32.mrf.mxu0
      %721 = vmatprep.mubr.f32.mxu0 %v542
      %722 = vmatmul.mubr.f32.gmra.mxu0 %v541
      %v723 = vpop.f32.mrf.mxu0
      %v724 = vadd.f32 0.0, %v723
      %v725 = vpop.f32.mrf.mxu0
      %726 = vmatprep.mubr.f32.mxu0 %v544
      %727 = vmatmul.mubr.f32.gmra.mxu0 %v543
      %v728 = vpop.f32.mrf.mxu0
      %v729 = vadd.f32 0.0, %v728
      %v730 = vpop.f32.mrf.mxu0
      %731 = vmatprep.mubr.f32.mxu0 %v546
      %732 = vmatmul.mubr.f32.gmra.mxu0 %v545
      %v733 = vpop.f32.mrf.mxu0
      %v734 = vadd.f32 0.0, %v733
      %v735 = vpop.f32.mrf.mxu0
      %736 = vdwg.mxu0
      %v737 = vld [vmem:[%s420] sm:$0xff]
      %v738 = vld [vmem:[%s420 + $0x8] sm:$0xff]
      %v739 = vld [vmem:[%s420 + $0x10] sm:$0xff]
      %v740 = vld [vmem:[%s420 + $0x18] sm:$0xff]
      %v741 = vld [vmem:[%s420 + $0x20] sm:$0xff]
      %v742 = vld [vmem:[%s420 + $0x28] sm:$0xff]
      %v743 = vld [vmem:[%s420 + $0x30] sm:$0xff]
      %v744 = vld [vmem:[%s420 + $0x38] sm:$0xff]
      %v745 = vld [vmem:[%s420 + $0x40] sm:$0xff]
      %v746 = vld [vmem:[%s420 + $0x48] sm:$0xff]
      %v747 = vld [vmem:[%s420 + $0x50] sm:$0xff]
      %v748 = vld [vmem:[%s420 + $0x58] sm:$0xff]
      %v749 = vld [vmem:[%s420 + $0x60] sm:$0xff]
      %v750 = vld [vmem:[%s420 + $0x68] sm:$0xff]
      %v751 = vld [vmem:[%s420 + $0x70] sm:$0xff]
      %v752 = vld [vmem:[%s420 + $0x78] sm:$0xff]
      %v753 = vld [vmem:[%s420 + $0x80] sm:$0xff]
      %v754 = vld [vmem:[%s420 + $0x88] sm:$0xff]
      %v755 = vld [vmem:[%s420 + $0x90] sm:$0xff]
      %v756 = vld [vmem:[%s420 + $0x98] sm:$0xff]
      %v757 = vld [vmem:[%s420 + $0xa0] sm:$0xff]
      %v758 = vld [vmem:[%s420 + $0xa8] sm:$0xff]
      %v759 = vld [vmem:[%s420 + $0xb0] sm:$0xff]
      %v760 = vld [vmem:[%s420 + $0xb8] sm:$0xff]
      %v761 = vld [vmem:[%s420 + $0xc0] sm:$0xff]
      %v762 = vld [vmem:[%s420 + $0xc8] sm:$0xff]
      %v763 = vld [vmem:[%s420 + $0xd0] sm:$0xff]
      %v764 = vld [vmem:[%s420 + $0xd8] sm:$0xff]
      %v765 = vld [vmem:[%s420 + $0xe0] sm:$0xff]
      %v766 = vld [vmem:[%s420 + $0xe8] sm:$0xff]
      %v767 = vld [vmem:[%s420 + $0xf0] sm:$0xff]
      %v768 = vld [vmem:[%s420 + $0xf8] sm:$0xff]
      %v769 = vld [vmem:[%s420 + $0x100] sm:$0xff]
      %v770 = vld [vmem:[%s420 + $0x108] sm:$0xff]
      %v771 = vld [vmem:[%s420 + $0x110] sm:$0xff]
      %v772 = vld [vmem:[%s420 + $0x118] sm:$0xff]
      %v773 = vld [vmem:[%s420 + $0x120] sm:$0xff]
      %v774 = vld [vmem:[%s420 + $0x128] sm:$0xff]
      %v775 = vld [vmem:[%s420 + $0x130] sm:$0xff]
      %v776 = vld [vmem:[%s420 + $0x138] sm:$0xff]
      %v777 = vld [vmem:[%s420 + $0x140] sm:$0xff]
      %v778 = vld [vmem:[%s420 + $0x148] sm:$0xff]
      %v779 = vld [vmem:[%s420 + $0x150] sm:$0xff]
      %v780 = vld [vmem:[%s420 + $0x158] sm:$0xff]
      %v781 = vld [vmem:[%s420 + $0x160] sm:$0xff]
      %v782 = vld [vmem:[%s420 + $0x168] sm:$0xff]
      %v783 = vld [vmem:[%s420 + $0x170] sm:$0xff]
      %v784 = vld [vmem:[%s420 + $0x178] sm:$0xff]
      %v785 = vld [vmem:[%s420 + $0x180] sm:$0xff]
      %v786 = vld [vmem:[%s420 + $0x188] sm:$0xff]
      %787 = vmatprep.subr.mxu0 0.0
      %788 = vmatpush1.msra.mxu0 %v480
      %789 = vmatprep.subr.mxu0 0.0
      %790 = vmatpush1.msra.mxu0 %v479
      %791 = vmatprep.subr.mxu0 0.0
      %792 = vmatpush1.msra.mxu0 %v478
      %793 = vmatprep.subr.mxu0 0.0
      %794 = vmatpush1.msra.mxu0 %v477
      %795 = vmatprep.subr.mxu0 0.0
      %796 = vmatpush1.msra.mxu0 %v476
      %797 = vmatprep.subr.mxu0 0.0
      %798 = vmatpush1.msra.mxu0 %v475
      %799 = vmatprep.subr.mxu0 0.0
      %800 = vmatpush1.msra.mxu0 %v474
      %801 = vmatprep.subr.mxu0 0.0
      %802 = vmatpush1.msra.mxu0 %v473
      %803 = vmatprep.subr.mxu0 0.0
      %804 = vmatpush1.msra.mxu0 %v472
      %805 = vmatprep.subr.mxu0 0.0
      %806 = vmatpush1.msra.mxu0 %v471
      %807 = vmatprep.subr.mxu0 0.0
      %808 = vmatpush1.msra.mxu0 %v470
      %809 = vmatprep.subr.mxu0 0.0
      %810 = vmatpush1.msra.mxu0 %v469
      %811 = vmatprep.subr.mxu0 0.0
      %812 = vmatpush1.msra.mxu0 %v468
      %813 = vmatprep.subr.mxu0 0.0
      %814 = vmatpush1.msra.mxu0 %v467
      %815 = vmatprep.subr.mxu0 0.0
      %816 = vmatpush1.msra.mxu0 %v466
      %817 = vmatprep.subr.mxu0 0.0
      %818 = vmatpush1.msra.mxu0 %v465
      %819 = vmatprep.subr.mxu0 0.0
      %820 = vmatpush2.msra.mxu0 %v496
      %821 = vmatprep.subr.mxu0 0.0
      %822 = vmatpush2.msra.mxu0 %v495
      %823 = vmatprep.subr.mxu0 0.0
      %824 = vmatpush2.msra.mxu0 %v494
      %825 = vmatprep.subr.mxu0 0.0
      %826 = vmatpush2.msra.mxu0 %v493
      %827 = vmatprep.subr.mxu0 0.0
      %828 = vmatpush2.msra.mxu0 %v492
      %829 = vmatprep.subr.mxu0 0.0
      %830 = vmatpush2.msra.mxu0 %v491
      %831 = vmatprep.subr.mxu0 0.0
      %832 = vmatpush2.msra.mxu0 %v490
      %833 = vmatprep.subr.mxu0 0.0
      %834 = vmatpush2.msra.mxu0 %v489
      %835 = vmatprep.subr.mxu0 0.0
      %836 = vmatpush2.msra.mxu0 %v488
      %837 = vmatprep.subr.mxu0 0.0
      %838 = vmatpush2.msra.mxu0 %v487
      %839 = vmatprep.subr.mxu0 0.0
      %840 = vmatpush2.msra.mxu0 %v486
      %841 = vmatprep.subr.mxu0 0.0
      %842 = vmatpush2.msra.mxu0 %v485
      %843 = vmatprep.subr.mxu0 0.0
      %844 = vmatpush2.msra.mxu0 %v484
      %845 = vmatprep.subr.mxu0 0.0
      %846 = vmatpush2.msra.mxu0 %v483
      %847 = vmatprep.subr.mxu0 0.0
      %848 = vmatpush2.msra.mxu0 %v482
      %849 = vmatprep.subr.mxu0 0.0
      %850 = vmatpush2.msra.mxu0 %v481
      %851 = vmatprep.mubr.f32.mxu0 %v738
      %852 = vmatmul.mubr.f32.gmra.mxu0 %v737
      %v853 = vpop.f32.mrf.mxu0
      %v854 = vadd.f32 0.0, %v853
      %v855 = vpop.f32.mrf.mxu0
      %856 = vmatprep.mubr.f32.mxu0 %v740
      %857 = vmatmul.mubr.f32.gmra.mxu0 %v739
      %v858 = vpop.f32.mrf.mxu0
      %v859 = vadd.f32 0.0, %v858
      %v860 = vpop.f32.mrf.mxu0
      %861 = vmatprep.mubr.f32.mxu0 %v742
      %862 = vmatmul.mubr.f32.gmra.mxu0 %v741
      %v863 = vpop.f32.mrf.mxu0
      %v864 = vadd.f32 0.0, %v863
      %v865 = vpop.f32.mrf.mxu0
      %866 = vmatprep.mubr.f32.mxu0 %v744
      %867 = vmatmul.mubr.f32.gmra.mxu0 %v743
      %v868 = vpop.f32.mrf.mxu0
      %v869 = vadd.f32 0.0, %v868
      %v870 = vpop.f32.mrf.mxu0
      %871 = vmatprep.mubr.f32.mxu0 %v746
      %872 = vmatmul.mubr.f32.gmra.mxu0 %v745
      %v873 = vpop.f32.mrf.mxu0
      %v874 = vadd.f32 0.0, %v873
      %v875 = vpop.f32.mrf.mxu0
      %876 = vmatprep.mubr.f32.mxu0 %v748
      %877 = vmatmul.mubr.f32.gmra.mxu0 %v747
      %v878 = vpop.f32.mrf.mxu0
      %v879 = vadd.f32 0.0, %v878
      %v880 = vpop.f32.mrf.mxu0
      %881 = vmatprep.mubr.f32.mxu0 %v750
      %882 = vmatmul.mubr.f32.gmra.mxu0 %v749
      %v883 = vpop.f32.mrf.mxu0
      %v884 = vadd.f32 0.0, %v883
      %v885 = vpop.f32.mrf.mxu0
      %886 = vmatprep.mubr.f32.mxu0 %v752
      %887 = vmatmul.mubr.f32.gmra.mxu0 %v751
      %v888 = vpop.f32.mrf.mxu0
      %v889 = vadd.f32 0.0, %v888
      %v890 = vpop.f32.mrf.mxu0
      %891 = vmatprep.mubr.f32.mxu0 %v754
      %892 = vmatmul.mubr.f32.gmra.mxu0 %v753
      %v893 = vpop.f32.mrf.mxu0
      %v894 = vadd.f32 0.0, %v893
      %v895 = vpop.f32.mrf.mxu0
      %896 = vmatprep.mubr.f32.mxu0 %v756
      %897 = vmatmul.mubr.f32.gmra.mxu0 %v755
      %v898 = vpop.f32.mrf.mxu0
      %v899 = vadd.f32 0.0, %v898
      %v900 = vpop.f32.mrf.mxu0
      %901 = vmatprep.mubr.f32.mxu0 %v758
      %902 = vmatmul.mubr.f32.gmra.mxu0 %v757
      %v903 = vpop.f32.mrf.mxu0
      %v904 = vadd.f32 0.0, %v903
      %v905 = vpop.f32.mrf.mxu0
      %906 = vmatprep.mubr.f32.mxu0 %v760
      %907 = vmatmul.mubr.f32.gmra.mxu0 %v759
      %v908 = vpop.f32.mrf.mxu0
      %v909 = vadd.f32 0.0, %v908
      %v910 = vpop.f32.mrf.mxu0
      %911 = vmatprep.mubr.f32.mxu0 %v762
      %912 = vmatmul.mubr.f32.gmra.mxu0 %v761
      %v913 = vpop.f32.mrf.mxu0
      %v914 = vadd.f32 0.0, %v913
      %v915 = vpop.f32.mrf.mxu0
      %916 = vmatprep.mubr.f32.mxu0 %v764
      %917 = vmatmul.mubr.f32.gmra.mxu0 %v763
      %v918 = vpop.f32.mrf.mxu0
      %v919 = vadd.f32 0.0, %v918
      %v920 = vpop.f32.mrf.mxu0
      %921 = vmatprep.mubr.f32.mxu0 %v766
      %922 = vmatmul.mubr.f32.gmra.mxu0 %v765
      %v923 = vpop.f32.mrf.mxu0
      %v924 = vadd.f32 0.0, %v923
      %v925 = vpop.f32.mrf.mxu0
      %926 = vmatprep.mubr.f32.mxu0 %v768
      %927 = vmatmul.mubr.f32.gmra.mxu0 %v767
      %v928 = vpop.f32.mrf.mxu0
      %v929 = vadd.f32 0.0, %v928
      %v930 = vpop.f32.mrf.mxu0
      %931 = vmatprep.mubr.f32.mxu0 %v770
      %932 = vmatmul.mubr.f32.gmra.mxu0 %v769
      %v933 = vpop.f32.mrf.mxu0
      %v934 = vadd.f32 0.0, %v933
      %v935 = vpop.f32.mrf.mxu0
      %936 = vmatprep.mubr.f32.mxu0 %v772
      %937 = vmatmul.mubr.f32.gmra.mxu0 %v771
      %v938 = vpop.f32.mrf.mxu0
      %v939 = vadd.f32 0.0, %v938
      %v940 = vpop.f32.mrf.mxu0
      %941 = vmatprep.mubr.f32.mxu0 %v774
      %942 = vmatmul.mubr.f32.gmra.mxu0 %v773
      %v943 = vpop.f32.mrf.mxu0
      %v944 = vadd.f32 0.0, %v943
      %v945 = vpop.f32.mrf.mxu0
      %946 = vmatprep.mubr.f32.mxu0 %v776
      %947 = vmatmul.mubr.f32.gmra.mxu0 %v775
      %v948 = vpop.f32.mrf.mxu0
      %v949 = vadd.f32 0.0, %v948
      %v950 = vpop.f32.mrf.mxu0
      %951 = vmatprep.mubr.f32.mxu0 %v778
      %952 = vmatmul.mubr.f32.gmra.mxu0 %v777
      %v953 = vpop.f32.mrf.mxu0
      %v954 = vadd.f32 0.0, %v953
      %v955 = vpop.f32.mrf.mxu0
      %956 = vmatprep.mubr.f32.mxu0 %v780
      %957 = vmatmul.mubr.f32.gmra.mxu0 %v779
      %v958 = vpop.f32.mrf.mxu0
      %v959 = vadd.f32 0.0, %v958
      %v960 = vpop.f32.mrf.mxu0
      %961 = vmatprep.mubr.f32.mxu0 %v782
      %962 = vmatmul.mubr.f32.gmra.mxu0 %v781
      %v963 = vpop.f32.mrf.mxu0
      %v964 = vadd.f32 0.0, %v963
      %v965 = vpop.f32.mrf.mxu0
      %966 = vmatprep.mubr.f32.mxu0 %v784
      %967 = vmatmul.mubr.f32.gmra.mxu0 %v783
      %v968 = vpop.f32.mrf.mxu0
      %v969 = vadd.f32 0.0, %v968
      %v970 = vpop.f32.mrf.mxu0
      %971 = vmatprep.mubr.f32.mxu0 %v786
      %972 = vmatmul.mubr.f32.gmra.mxu0 %v785
      %v973 = vpop.f32.mrf.mxu0
      %v974 = vadd.f32 0.0, %v973
      %v975 = vpop.f32.mrf.mxu0
      %976 = vdwg.mxu0
      %vm977 = vcmask 130048
      %v978 = vsel %vm977, %v614, -inf
      %v979 = vsel %vm977, %v619, -inf
      %v980 = vsel %vm977, %v624, -inf
      %vm981 = vcmask 122880
      %v982 = vsel %vm981, %v629, -inf
      %v983 = vmax.f32 %v978, %v979
      %v984 = vmax.f32 %v980, %v982
      %v985 = vmax.f32 %v983, %v984
      %v986 = vrot.slane %v985, 4
      %v987 = vmax.f32 %v985, %v986
      %v988 = vrot.slane %v987, 2
      %v989 = vmax.f32 %v987, %v988
      %v990 = vrot.slane %v989, 1
      %v991 = vmax.f32 %v989, %v990
      %vm992 = vcmask 130049
      %v993 = vsel %vm992, %v629, -inf
      %v994 = vsel %vm977, %v634, -inf
      %v995 = vsel %vm977, %v639, -inf
      %vm996 = vcmask 123904
      %v997 = vsel %vm996, %v644, -inf
      %v998 = vmax.f32 %v993, %v994
      %v999 = vmax.f32 %v995, %v997
      %v1000 = vmax.f32 %v998, %v999
      %v1001 = vrot.slane %v1000, 4
      %v1002 = vmax.f32 %v1000, %v1001
      %v1003 = vrot.slane %v1002, 2
      %v1004 = vmax.f32 %v1002, %v1003
      %v1005 = vrot.slane %v1004, 1
      %v1006 = vmax.f32 %v1004, %v1005
      %vm1007 = vcmask 130050
      %v1008 = vsel %vm1007, %v644, -inf
      %v1009 = vsel %vm977, %v649, -inf
      %v1010 = vsel %vm977, %v654, -inf
      %vm1011 = vcmask 124928
      %v1012 = vsel %vm1011, %v659, -inf
      %v1013 = vmax.f32 %v1008, %v1009
      %v1014 = vmax.f32 %v1010, %v1012
      %v1015 = vmax.f32 %v1013, %v1014
      %v1016 = vrot.slane %v1015, 4
      %v1017 = vmax.f32 %v1015, %v1016
      %v1018 = vrot.slane %v1017, 2
      %v1019 = vmax.f32 %v1017, %v1018
      %v1020 = vrot.slane %v1019, 1
      %v1021 = vmax.f32 %v1019, %v1020
      %vm1022 = vcmask 130051
      %v1023 = vsel %vm1022, %v659, -inf
      %v1024 = vsel %vm977, %v664, -inf
      %v1025 = vsel %vm977, %v669, -inf
      %vm1026 = vcmask 125952
      %v1027 = vsel %vm1026, %v674, -inf
      %v1028 = vmax.f32 %v1023, %v1024
      %v1029 = vmax.f32 %v1025, %v1027
      %v1030 = vmax.f32 %v1028, %v1029
      %v1031 = vrot.slane %v1030, 4
      %v1032 = vmax.f32 %v1030, %v1031
      %v1033 = vrot.slane %v1032, 2
      %v1034 = vmax.f32 %v1032, %v1033
      %v1035 = vrot.slane %v1034, 1
      %v1036 = vmax.f32 %v1034, %v1035
      %vm1037 = vcmask 130052
      %v1038 = vsel %vm1037, %v674, -inf
      %v1039 = vsel %vm977, %v679, -inf
      %v1040 = vsel %vm977, %v684, -inf
      %vm1041 = vcmask 126976
      %v1042 = vsel %vm1041, %v689, -inf
      %v1043 = vmax.f32 %v1038, %v1039
      %v1044 = vmax.f32 %v1040, %v1042
      %v1045 = vmax.f32 %v1043, %v1044
      %v1046 = vrot.slane %v1045, 4
      %v1047 = vmax.f32 %v1045, %v1046
      %v1048 = vrot.slane %v1047, 2
      %v1049 = vmax.f32 %v1047, %v1048
      %v1050 = vrot.slane %v1049, 1
      %v1051 = vmax.f32 %v1049, %v1050
      %vm1052 = vcmask 130053
      %v1053 = vsel %vm1052, %v689, -inf
      %v1054 = vsel %vm977, %v694, -inf
      %v1055 = vsel %vm977, %v699, -inf
      %vm1056 = vcmask 128000
      %v1057 = vsel %vm1056, %v704, -inf
      %v1058 = vmax.f32 %v1053, %v1054
      %v1059 = vmax.f32 %v1055, %v1057
      %v1060 = vmax.f32 %v1058, %v1059
      %v1061 = vrot.slane %v1060, 4
      %v1062 = vmax.f32 %v1060, %v1061
      %v1063 = vrot.slane %v1062, 2
      %v1064 = vmax.f32 %v1062, %v1063
      %v1065 = vrot.slane %v1064, 1
      %v1066 = vmax.f32 %v1064, %v1065
      %vm1067 = vcmask 130054
      %v1068 = vsel %vm1067, %v704, -inf
      %v1069 = vsel %vm977, %v709, -inf
      %v1070 = vsel %vm977, %v714, -inf
      %vm1071 = vcmask 129024
      %v1072 = vsel %vm1071, %v719, -inf
      %v1073 = vmax.f32 %v1068, %v1069
      %v1074 = vmax.f32 %v1070, %v1072
      %v1075 = vmax.f32 %v1073, %v1074
      %v1076 = vrot.slane %v1075, 4
      %v1077 = vmax.f32 %v1075, %v1076
      %v1078 = vrot.slane %v1077, 2
      %v1079 = vmax.f32 %v1077, %v1078
      %v1080 = vrot.slane %v1079, 1
      %v1081 = vmax.f32 %v1079, %v1080
      %vm1082 = vcmask 130055
      %v1083 = vsel %vm1082, %v719, -inf
      %v1084 = vsel %vm977, %v724, -inf
      %v1085 = vsel %vm977, %v729, -inf
      %v1086 = vsel %vm977, %v734, -inf
      %v1087 = vmax.f32 %v1083, %v1084
      %v1088 = vmax.f32 %v1085, %v1086
      %v1089 = vmax.f32 %v1087, %v1088
      %v1090 = vrot.slane %v1089, 4
      %v1091 = vmax.f32 %v1089, %v1090
      %v1092 = vrot.slane %v1091, 2
      %v1093 = vmax.f32 %v1091, %v1092
      %v1094 = vrot.slane %v1093, 1
      %v1095 = vmax.f32 %v1093, %v1094
      %vm1096 = vcmask 1040384
      %v1097 = vsel %vm1096, %v991, %v1006
      %vm1098 = vcmask 1041408
      %v1099 = vsel %vm1098, %v1097, %v1021
      %vm1100 = vcmask 1042432
      %v1101 = vsel %vm1100, %v1099, %v1036
      %vm1102 = vcmask 1043456
      %v1103 = vsel %vm1102, %v1101, %v1051
      %vm1104 = vcmask 1044480
      %v1105 = vsel %vm1104, %v1103, %v1066
      %vm1106 = vcmask 1045504
      %v1107 = vsel %vm1106, %v1105, %v1081
      %vm1108 = vcmask 1046528
      %v1109 = vsel %vm1108, %v1107, %v1095
      %vm1110 = vcmask 31744
      %v1111 = vsel %vm1110, %v854, -inf
      %v1112 = vsel %vm1110, %v859, -inf
      %v1113 = vsel %vm1110, %v864, -inf
      %vm1114 = vcmask 24576
      %v1115 = vsel %vm1114, %v869, -inf
      %v1116 = vmax.f32 %v1111, %v1112
      %v1117 = vmax.f32 %v1113, %v1115
      %v1118 = vmax.f32 %v1116, %v1117
      %v1119 = vrot.slane %v1118, 4
      %v1120 = vmax.f32 %v1118, %v1119
      %v1121 = vrot.slane %v1120, 2
      %v1122 = vmax.f32 %v1120, %v1121
      %v1123 = vrot.slane %v1122, 1
      %v1124 = vmax.f32 %v1122, %v1123
      %vm1125 = vcmask 31745
      %v1126 = vsel %vm1125, %v869, -inf
      %v1127 = vsel %vm1110, %v874, -inf
      %v1128 = vsel %vm1110, %v879, -inf
      %vm1129 = vcmask 25600
      %v1130 = vsel %vm1129, %v884, -inf
      %v1131 = vmax.f32 %v1126, %v1127
      %v1132 = vmax.f32 %v1128, %v1130
      %v1133 = vmax.f32 %v1131, %v1132
      %v1134 = vrot.slane %v1133, 4
      %v1135 = vmax.f32 %v1133, %v1134
      %v1136 = vrot.slane %v1135, 2
      %v1137 = vmax.f32 %v1135, %v1136
      %v1138 = vrot.slane %v1137, 1
      %v1139 = vmax.f32 %v1137, %v1138
      %vm1140 = vcmask 31746
      %v1141 = vsel %vm1140, %v884, -inf
      %v1142 = vsel %vm1110, %v889, -inf
      %v1143 = vsel %vm1110, %v894, -inf
      %vm1144 = vcmask 26624
      %v1145 = vsel %vm1144, %v899, -inf
      %v1146 = vmax.f32 %v1141, %v1142
      %v1147 = vmax.f32 %v1143, %v1145
      %v1148 = vmax.f32 %v1146, %v1147
      %v1149 = vrot.slane %v1148, 4
      %v1150 = vmax.f32 %v1148, %v1149
      %v1151 = vrot.slane %v1150, 2
      %v1152 = vmax.f32 %v1150, %v1151
      %v1153 = vrot.slane %v1152, 1
      %v1154 = vmax.f32 %v1152, %v1153
      %vm1155 = vcmask 31747
      %v1156 = vsel %vm1155, %v899, -inf
      %v1157 = vsel %vm1110, %v904, -inf
      %v1158 = vsel %vm1110, %v909, -inf
      %vm1159 = vcmask 27648
      %v1160 = vsel %vm1159, %v914, -inf
      %v1161 = vmax.f32 %v1156, %v1157
      %v1162 = vmax.f32 %v1158, %v1160
      %v1163 = vmax.f32 %v1161, %v1162
      %v1164 = vrot.slane %v1163, 4
      %v1165 = vmax.f32 %v1163, %v1164
      %v1166 = vrot.slane %v1165, 2
      %v1167 = vmax.f32 %v1165, %v1166
      %v1168 = vrot.slane %v1167, 1
      %v1169 = vmax.f32 %v1167, %v1168
      %vm1170 = vcmask 31748
      %v1171 = vsel %vm1170, %v914, -inf
      %v1172 = vsel %vm1110, %v919, -inf
      %v1173 = vsel %vm1110, %v924, -inf
      %vm1174 = vcmask 28672
      %v1175 = vsel %vm1174, %v929, -inf
      %v1176 = vmax.f32 %v1171, %v1172
      %v1177 = vmax.f32 %v1173, %v1175
      %v1178 = vmax.f32 %v1176, %v1177
      %v1179 = vrot.slane %v1178, 4
      %v1180 = vmax.f32 %v1178, %v1179
      %v1181 = vrot.slane %v1180, 2
      %v1182 = vmax.f32 %v1180, %v1181
      %v1183 = vrot.slane %v1182, 1
      %v1184 = vmax.f32 %v1182, %v1183
      %vm1185 = vcmask 31749
      %v1186 = vsel %vm1185, %v929, -inf
      %v1187 = vsel %vm1110, %v934, -inf
      %v1188 = vsel %vm1110, %v939, -inf
      %vm1189 = vcmask 29696
      %v1190 = vsel %vm1189, %v944, -inf
      %v1191 = vmax.f32 %v1186, %v1187
      %v1192 = vmax.f32 %v1188, %v1190
      %v1193 = vmax.f32 %v1191, %v1192
      %v1194 = vrot.slane %v1193, 4
      %v1195 = vmax.f32 %v1193, %v1194
      %v1196 = vrot.slane %v1195, 2
      %v1197 = vmax.f32 %v1195, %v1196
      %v1198 = vrot.slane %v1197, 1
      %v1199 = vmax.f32 %v1197, %v1198
      %vm1200 = vcmask 31750
      %v1201 = vsel %vm1200, %v944, -inf
      %v1202 = vsel %vm1110, %v949, -inf
      %v1203 = vsel %vm1110, %v954, -inf
      %vm1204 = vcmask 30720
      %v1205 = vsel %vm1204, %v959, -inf
      %v1206 = vmax.f32 %v1201, %v1202
      %v1207 = vmax.f32 %v1203, %v1205
      %v1208 = vmax.f32 %v1206, %v1207
      %v1209 = vrot.slane %v1208, 4
      %v1210 = vmax.f32 %v1208, %v1209
      %v1211 = vrot.slane %v1210, 2
      %v1212 = vmax.f32 %v1210, %v1211
      %v1213 = vrot.slane %v1212, 1
      %v1214 = vmax.f32 %v1212, %v1213
      %vm1215 = vcmask 31751
      %v1216 = vsel %vm1215, %v959, -inf
      %v1217 = vsel %vm1110, %v964, -inf
      %v1218 = vsel %vm1110, %v969, -inf
      %v1219 = vsel %vm1110, %v974, -inf
      %v1220 = vmax.f32 %v1216, %v1217
      %v1221 = vmax.f32 %v1218, %v1219
      %v1222 = vmax.f32 %v1220, %v1221
      %v1223 = vrot.slane %v1222, 4
      %v1224 = vmax.f32 %v1222, %v1223
      %v1225 = vrot.slane %v1224, 2
      %v1226 = vmax.f32 %v1224, %v1225
      %v1227 = vrot.slane %v1226, 1
      %v1228 = vmax.f32 %v1226, %v1227
      %v1229 = vsel %vm1096, %v1124, %v1139
      %v1230 = vsel %vm1098, %v1229, %v1154
      %v1231 = vsel %vm1100, %v1230, %v1169
      %v1232 = vsel %vm1102, %v1231, %v1184
      %v1233 = vsel %vm1104, %v1232, %v1199
      %v1234 = vsel %vm1106, %v1233, %v1214
      %v1235 = vsel %vm1108, %v1234, %v1228
      %1236 = vst.msk [vmem:[%s428] sm:$0xff] %vm977, %v1109
      %1237 = vst.msk [vmem:[%s432] sm:$0xff] %vm1110, %v1235
      %v1238 = vld [vmem:[%s5] sm:$0xff]
      %v1239 = vld [vmem:[%s5 + $0x8] sm:$0xff]
      %v1240 = vld [vmem:[%s6] sm:$0xf]
      %v1242 = vsel %vm1110, %v1235, 0
      %v1245 = vsel %vm1102, %v1240, 0
      %1247 = vmatprep.subr.mxu0 0.0
      %1248 = vmatpush1.msra.mxu0 0.0
      %1249 = vmatprep.subr.mxu0 0.0
      %1250 = vmatpush1.msra.mxu0 0.0
      %1251 = vmatprep.subr.mxu0 0.0
      %1252 = vmatpush1.msra.mxu0 0.0
      %1253 = vmatprep.subr.mxu0 0.0
      %1254 = vmatpush1.msra.mxu0 0.0
      %1255 = vmatprep.subr.mxu0 0.0
      %1256 = vmatpush1.msra.mxu0 0.0
      %1257 = vmatprep.subr.mxu0 0.0
      %1258 = vmatpush1.msra.mxu0 0.0
      %1259 = vmatprep.subr.mxu0 0.0
      %1260 = vmatpush1.msra.mxu0 0.0
      %1261 = vmatprep.subr.mxu0 0.0
      %1262 = vmatpush1.msra.mxu0 0.0
      %1263 = vmatprep.subr.mxu0 0.0
      %1264 = vmatpush1.msra.mxu0 0.0
      %1265 = vmatprep.subr.mxu0 0.0
      %1266 = vmatpush1.msra.mxu0 0.0
      %1267 = vmatprep.subr.mxu0 0.0
      %1268 = vmatpush1.msra.mxu0 0.0
      %1269 = vmatprep.subr.mxu0 0.0
      %1270 = vmatpush1.msra.mxu0 0.0
      %1271 = vmatprep.subr.mxu0 0.0
      %1272 = vmatpush1.msra.mxu0 0.0
      %1273 = vmatprep.subr.mxu0 0.0
      %1274 = vmatpush1.msra.mxu0 0.0
      %1275 = vmatprep.subr.mxu0 0.0
      %1276 = vmatpush1.msra.mxu0 0.0
      %1277 = vmatprep.subr.mxu0 0.0
      %1278 = vmatpush1.msra.mxu0 %v1245
      %1279 = vmatprep.subr.mxu0 0.0
      %1280 = vmatpush2.msra.mxu0 0.0
      %1281 = vmatprep.subr.mxu0 0.0
      %1282 = vmatpush2.msra.mxu0 0.0
      %1283 = vmatprep.subr.mxu0 0.0
      %1284 = vmatpush2.msra.mxu0 0.0
      %1285 = vmatprep.subr.mxu0 0.0
      %1286 = vmatpush2.msra.mxu0 0.0
      %1287 = vmatprep.subr.mxu0 0.0
      %1288 = vmatpush2.msra.mxu0 0.0
      %1289 = vmatprep.subr.mxu0 0.0
      %1290 = vmatpush2.msra.mxu0 0.0
      %1291 = vmatprep.subr.mxu0 0.0
      %1292 = vmatpush2.msra.mxu0 0.0
      %1293 = vmatprep.subr.mxu0 0.0
      %1294 = vmatpush2.msra.mxu0 0.0
      %1295 = vmatprep.subr.mxu0 0.0
      %1296 = vmatpush2.msra.mxu0 0.0
      %1297 = vmatprep.subr.mxu0 0.0
      %1298 = vmatpush2.msra.mxu0 0.0
      %1299 = vmatprep.subr.mxu0 0.0
      %1300 = vmatpush2.msra.mxu0 0.0
      %1301 = vmatprep.subr.mxu0 0.0
      %1302 = vmatpush2.msra.mxu0 0.0
      %1303 = vmatprep.subr.mxu0 0.0
      %1304 = vmatpush2.msra.mxu0 0.0
      %1305 = vmatprep.subr.mxu0 0.0
      %1306 = vmatpush2.msra.mxu0 0.0
      %1307 = vmatprep.subr.mxu0 0.0
      %1308 = vmatpush2.msra.mxu0 0.0
      %1309 = vmatprep.subr.mxu0 0.0
      %1310 = vmatpush2.msra.mxu0 0.0
      %1311 = vmatprep.mubr.f32.mxu0 0.0
      %1312 = vmatmul.mubr.f32.gmra.mxu0 %v1242
      %v1313 = vpop.f32.mrf.mxu0
      %v1314 = vadd.f32 0.0, %v1313
      %v1315 = vpop.f32.mrf.mxu0
      %1316 = vdwg.mxu0
      %v1318 = vsel %vm977, %v1109, 0
      %1320 = vmatprep.subr.mxu0 0.0
      %1321 = vmatpush1.msra.mxu0 0.0
      %1322 = vmatprep.subr.mxu0 0.0
      %1323 = vmatpush1.msra.mxu0 0.0
      %1324 = vmatprep.subr.mxu0 0.0
      %1325 = vmatpush1.msra.mxu0 0.0
      %1326 = vmatprep.subr.mxu0 0.0
      %1327 = vmatpush1.msra.mxu0 0.0
      %1328 = vmatprep.subr.mxu0 0.0
      %1329 = vmatpush1.msra.mxu0 0.0
      %1330 = vmatprep.subr.mxu0 0.0
      %1331 = vmatpush1.msra.mxu0 0.0
      %1332 = vmatprep.subr.mxu0 0.0
      %1333 = vmatpush1.msra.mxu0 0.0
      %1334 = vmatprep.subr.mxu0 0.0
      %1335 = vmatpush1.msra.mxu0 0.0
      %1336 = vmatprep.subr.mxu0 0.0
      %1337 = vmatpush1.msra.mxu0 0.0
      %1338 = vmatprep.subr.mxu0 0.0
      %1339 = vmatpush1.msra.mxu0 0.0
      %1340 = vmatprep.subr.mxu0 0.0
      %1341 = vmatpush1.msra.mxu0 0.0
      %1342 = vmatprep.subr.mxu0 0.0
      %1343 = vmatpush1.msra.mxu0 0.0
      %1344 = vmatprep.subr.mxu0 0.0
      %1345 = vmatpush1.msra.mxu0 0.0
      %1346 = vmatprep.subr.mxu0 0.0
      %1347 = vmatpush1.msra.mxu0 0.0
      %1348 = vmatprep.subr.mxu0 0.0
      %1349 = vmatpush1.msra.mxu0 %v1239
      %1350 = vmatprep.subr.mxu0 0.0
      %1351 = vmatpush1.msra.mxu0 %v1238
      %1352 = vmatprep.subr.mxu0 0.0
      %1353 = vmatpush2.msra.mxu0 0.0
      %1354 = vmatprep.subr.mxu0 0.0
      %1355 = vmatpush2.msra.mxu0 0.0
      %1356 = vmatprep.subr.mxu0 0.0
      %1357 = vmatpush2.msra.mxu0 0.0
      %1358 = vmatprep.subr.mxu0 0.0
      %1359 = vmatpush2.msra.mxu0 0.0
      %1360 = vmatprep.subr.mxu0 0.0
      %1361 = vmatpush2.msra.mxu0 0.0
      %1362 = vmatprep.subr.mxu0 0.0
      %1363 = vmatpush2.msra.mxu0 0.0
      %1364 = vmatprep.subr.mxu0 0.0
      %1365 = vmatpush2.msra.mxu0 0.0
      %1366 = vmatprep.subr.mxu0 0.0
      %1367 = vmatpush2.msra.mxu0 0.0
      %1368 = vmatprep.subr.mxu0 0.0
      %1369 = vmatpush2.msra.mxu0 0.0
      %1370 = vmatprep.subr.mxu0 0.0
      %1371 = vmatpush2.msra.mxu0 0.0
      %1372 = vmatprep.subr.mxu0 0.0
      %1373 = vmatpush2.msra.mxu0 0.0
      %1374 = vmatprep.subr.mxu0 0.0
      %1375 = vmatpush2.msra.mxu0 0.0
      %1376 = vmatprep.subr.mxu0 0.0
      %1377 = vmatpush2.msra.mxu0 0.0
      %1378 = vmatprep.subr.mxu0 0.0
      %1379 = vmatpush2.msra.mxu0 0.0
      %1380 = vmatprep.subr.mxu0 0.0
      %1381 = vmatpush2.msra.mxu0 0.0
      %1382 = vmatprep.subr.mxu0 0.0
      %1383 = vmatpush2.msra.mxu0 0.0
      %1384 = vmatprep.mubr.f32.mxu0 0.0
      %1385 = vmatmul.mubr.f32.gmra.mxu0 %v1318
      %v1386 = vpop.f32.mrf.mxu0
      %v1387 = vadd.f32 %v1314, %v1386
      %v1388 = vpop.f32.mrf.mxu0
      %1389 = vdwg.mxu0
      %v1390 = vld [vmem:[%s7] sm:$0x1]
      %v1392 = vlaneseq
      %v1393 = vshrl.u32 %v1392, 7
      %v1394 = vsub.s32 0, %v1393
      %v1395 = vrot.slane %v1390, %v1394
      %v1397 = vadd.f32 %v1387, %v1395
      %vm1398 = vcmask 80896
      %v1399 = vsel %vm1398, %v1397, -inf
      %1400 = vmax.xlane.f32.xlu0 %v1399
      %v1401 = vpop.xlane.xlu0 %1400
      %v1402 = vsub.f32 %v1397, %v1401
      %v1403 = vmul.f32 %v1402, 1.442695
      %v1404 = vpow.pop %v1403
      %v1405 = vsel %vm1398, %v1404, 0.0
      %1406 = vadd.xlane.f32.xlu0 %v1405
      %v1407 = vpop.xlane.xlu0 %1406
      %v1408 = vrcp.pop %v1407
      %v1409 = vmul.f32 %v1407, %v1408
      %v1410 = vsub.f32 2.0, %v1409
      %v1411 = vmul.f32 %v1408, %v1410
      %v1412 = vmul.f32 %v1404, %v1411
      %1413 = vst.msk [vmem:[%s424] sm:$0xff] %vm1398, %v1412
      %p1414 = scmp.lt.s32.totalorder %s28, 2
      %s1415 = scalar_select %p1414, %s28, 2
      %s1416 = smul.addr %s1415, 8
      %s1417 = scalar_lea.vmem %s8, %s1416
      %p1418 = scmp.lt.s32.totalorder %s28, 2
      %s1419 = scalar_select %p1418, %s28, 2
      %s1420 = smul.addr %s1419, 8
      %s1421 = scalar_lea.vmem %s9, %s1420
      %p1422 = scmp.lt.s32.totalorder %s28, 2
      %s1423 = scalar_select %p1422, %s28, 2
      %s1424 = smul.addr %s1423, 8
      %s1425 = scalar_lea.vmem %s10, %s1424
      // Predicated region
      $region49: #{resnet_mod_roi_head_forward.1} parent=47 // pred_check
        %p1426 = pneg %p217
      $region50: #{resnet_mod_roi_head_forward.1} parent=47 // pred_check_branch
        %1428 = sbr.rel (%p1426) target = $region52
      $region51: #{resnet_mod_roi_head_forward.1} parent=47 // pred_region
        _
      $region52: #{resnet_mod_roi_head_forward.1} parent=47 // pred_fallthru
        _
      // Predicated region
      $region53: #{resnet_mod_roi_head_forward.1} parent=47 // pred_check
        %p1429 = pneg %p243
      $region54: #{resnet_mod_roi_head_forward.1} parent=47 // pred_check_branch
        %1431 = sbr.rel (%p1429) target = $region56
      $region55: #{resnet_mod_roi_head_forward.1} parent=47 // pred_region
        _
      $region56: #{resnet_mod_roi_head_forward.1} parent=47 // pred_fallthru
        _
      // Predicated region
      $region57: #{resnet_mod_roi_head_forward.1} parent=47 // pred_check
        %p1432 = pneg %p269
      $region58: #{resnet_mod_roi_head_forward.1} parent=47 // pred_check_branch
        %1434 = sbr.rel (%p1432) target = $region60
      $region59: #{resnet_mod_roi_head_forward.1} parent=47 // pred_region
        _
      $region60: #{resnet_mod_roi_head_forward.1} parent=47 // pred_fallthru
        _
    $region48: #{resnet_mod_roi_head_forward.1} parent=5 // pred_fallthru
      _
    %p1435 = scmp.le.s32.totalorder 2, %s23
    // Predicated region
    $region61: #{resnet_mod_roi_head_forward.1} parent=5 // pred_check
      %p1436 = pneg %p1435
    $region62: #{resnet_mod_roi_head_forward.1} parent=5 // pred_check_branch
      %1438 = sbr.rel (%p1436) target = $region64
    $region63: #{resnet_mod_roi_head_forward.1} parent=5 // pred_region
      %s1439 = ssub.s32 %s23, 2
      // Predicated region
      $region65: #{resnet_mod_roi_head_forward.1} parent=63 // pred_check
        %p1440 = pneg %p223
      $region66: #{resnet_mod_roi_head_forward.1} parent=63 // pred_check_branch
        %1442 = sbr.rel (%p1440) target = $region68
      $region67: #{resnet_mod_roi_head_forward.1} parent=63 // pred_region
        %p1443 = scmp.lt.s32.totalorder %s29, 2
        %s1444 = scalar_select %p1443, %s29, 2
        %s1445 = smul.addr %s1444, 8
        %s1446 = scalar_lea.vmem %s8, %s1445
      $region68: #{resnet_mod_roi_head_forward.1} parent=63 // pred_fallthru
        _
      // Predicated region
      $region69: #{resnet_mod_roi_head_forward.1} parent=63 // pred_check
        %p1447 = pneg %p249
      $region70: #{resnet_mod_roi_head_forward.1} parent=63 // pred_check_branch
        %1449 = sbr.rel (%p1447) target = $region72
      $region71: #{resnet_mod_roi_head_forward.1} parent=63 // pred_region
        %p1450 = scmp.lt.s32.totalorder %s29, 2
        %s1451 = scalar_select %p1450, %s29, 2
        %s1452 = smul.addr %s1451, 8
        %s1453 = scalar_lea.vmem %s9, %s1452
      $region72: #{resnet_mod_roi_head_forward.1} parent=63 // pred_fallthru
        _
      // Predicated region
      $region73: #{resnet_mod_roi_head_forward.1} parent=63 // pred_check
        %p1454 = pneg %p275
      $region74: #{resnet_mod_roi_head_forward.1} parent=63 // pred_check_branch
        %1456 = sbr.rel (%p1454) target = $region76
      $region75: #{resnet_mod_roi_head_forward.1} parent=63 // pred_region
        %p1457 = scmp.lt.s32.totalorder %s29, 2
        %s1458 = scalar_select %p1457, %s29, 2
        %s1459 = smul.addr %s1458, 8
        %s1460 = scalar_lea.vmem %s10, %s1459
      $region76: #{resnet_mod_roi_head_forward.1} parent=63 // pred_fallthru
        _
    $region64: #{resnet_mod_roi_head_forward.1} parent=5 // pred_fallthru
      _
  $region6: #{resnet_mod_roi_head_forward.1} parent=0 // loop_footer
    %s27 = sadd.s32 1, %s23
  $region7: #{resnet_mod_roi_head_forward.1} parent=0 // loop_footer_branch
    %22 = sbr.rel target = $region3
  $region8: #{resnet_mod_roi_head_forward.1} parent=0 // loop_exit
    _

</llo_original>
